<compile_context>
chip_gen: v5e
topology: v5e:2x2
jax: 0.10.0
libtpu: 0.0.40
codegen_flags: <defaults>
</compile_context>

<pallas_src>
import functools

import jax
import jax.numpy as jnp
from jax.experimental import pallas as pl
from jax.experimental.pallas import tpu as pltpu

# Small stand-in shapes (original: S=15, C=512, H=W=14, n_outputs=83)
S = 15       # self.slices (AvgPool1d kernel_size == slices -> mean over slices)
C = 64       # feature channels
H = W = 8    # feature spatial
HID = 32     # hidden channels produced by conv1 (the "collapse" conv)
NOUT = 16    # n_outputs


def _round_up(x, m):
    return ((x + m - 1) // m) * m


def _tpu_vmem_capacity_bytes():
    """Physical VMEM per TensorCore (128 MiB on v5e/v6e, 64 MiB on v7x)."""
    try:
        cap = getattr(pltpu.get_tpu_info(), "vmem_capacity_bytes", None)
        if cap:
            return int(cap)
    except Exception:
        pass
    return 128 * 1024 * 1024


def _generation_config():
    """(vmem_limit_bytes, default K-split count) per TPU generation."""
    cap = _tpu_vmem_capacity_bytes()
    if cap <= 96 * 1024 * 1024:
        # v7x-class: 64 MiB VMEM per TC, 2 TensorCores -> split the K stream across cores.
        return 48 * 1024 * 1024, 2
    # v5e / v6e: 128 MiB VMEM, single TensorCore -> maximize tile size, no split.
    return 64 * 1024 * 1024, 1


def _pick_tk(k, s, hid, itemsize, vmem_budget):
    """Largest multiple-of-128 divisor of k whose double-buffered x/w1 tiles fit the budget."""
    s_pad = _round_up(s, max(8, 32 // itemsize))      # sublane padding of the x tile
    hid_lane = _round_up(hid, 128)                    # lane padding of the w1 tile
    per_k = 2 * (s_pad + hid_lane) * itemsize         # two pipeline buffers each, per unit of K
    max_tk = max(128, (vmem_budget // per_k) // 128 * 128)
    best = None
    t = 128
    while t <= min(k, max_tk):
        if k % t == 0:
            best = t
        t += 128
    # Fallback (K not a multiple of 128): take the whole K as one block.
    return best if best is not None else k


def _collapse_partial_kernel(x_ref, w1_ref, part_ref, acc_ref):
    """One K tile of the collapse conv; writes a partial [S, HID] per split on the last tile."""
    kk = pl.program_id(1)

    @pl.when(kk == 0)
    def _init():
        acc_ref[...] = jnp.zeros_like(acc_ref)

    # Natural NN orientation: x tile [S, tk] @ w1 tile [tk, HID]; f32 accumulation on the MXU.
    acc_ref[...] += jnp.dot(x_ref[...], w1_ref[...], preferred_element_type=jnp.float32)

    @pl.when(kk == pl.num_programs(1) - 1)
    def _writeback():
        part_ref[...] = acc_ref[...][None].astype(part_ref.dtype)


def _epilogue_kernel(part_ref, b1_ref, w23_ref, b23_ref, out_ref):
    """Combine partials + b1, fused conv2|attn 1x1 matmul, sigmoid gate, mean over slices."""
    nout = out_ref.shape[-1]
    h = jnp.sum(part_ref[...], axis=0) + b1_ref[...]                     # [S, HID] f32
    y = jnp.dot(h, w23_ref[...], preferred_element_type=jnp.float32) + b23_ref[...]
    x1 = y[:, :nout]
    attn = jax.nn.sigmoid(y[:, nout:])
    prod = x1 * attn                                                     # torch.mul(x1, attn)
    # transpose + unsqueeze + AvgPool1d(kernel=S) + squeeze  ==  mean over slices
    out_ref[...] = (jnp.sum(prod, axis=0, keepdims=True)
                    * (1.0 / prod.shape[0])).astype(out_ref.dtype)


def prepare_params(w1, b1, w2, b2, wa, ba, stream_dtype=jnp.bfloat16):
    """One-time parameter preprocessing (do at parameter-load time, NOT per forward call).

    w1 must be the PyTorch conv1 weight [HID, C, kh, kw] reshaped to [HID, K] then transposed
    to [K, HID], matching the NCHW row-major flattening of x.reshape(S, K).
    """
    w1p = jnp.asarray(w1).astype(stream_dtype)                                # [K, HID] streamed
    b1f = jnp.asarray(b1, jnp.float32).reshape(1, -1)                         # [1, HID]
    w23 = jnp.concatenate([jnp.asarray(w2), jnp.asarray(wa)], axis=1).astype(jnp.float32)
    b23 = jnp.concatenate([jnp.asarray(b2).reshape(1, -1),
                           jnp.asarray(ba).reshape(1, -1)], axis=1).astype(jnp.float32)
    return w1p, b1f, w23, b23


@functools.partial(jax.jit, static_argnames=("tk", "nsplit", "vmem_limit"))
def _forward(x, w1p, b1f, w23, b23, *, tk, nsplit, vmem_limit):
    s = x.shape[0]
    k = x.shape[1] * x.shape[2] * x.shape[3]
    hid = w1p.shape[-1]
    nout = w23.shape[-1] // 2
    nk = k // tk
    nkps = nk // nsplit

    # TODO(synk): have the ResNet backbone emit bf16 features directly so this cast copy disappears.
    x_flat = x.reshape(s, k).astype(w1p.dtype)

    itemsize = jnp.dtype(w1p.dtype).itemsize
    cost = pl.CostEstimate(
        flops=2 * s * k * hid,
        transcendentals=0,
        bytes_accessed=(s * k + k * hid) * itemsize + nsplit * s * hid * 4,
    )

    grid_spec = pltpu.PrefetchScalarGridSpec(
        num_scalar_prefetch=0,
        grid=(nsplit, nkps),
        in_specs=[
            pl.BlockSpec((s, tk), lambda c, kk: (0, c * nkps + kk)),       # x tile (per-split K)
            pl.BlockSpec((tk, hid), lambda c, kk: (c * nkps + kk, 0)),     # w1 tile (contiguous)
        ],
        out_specs=pl.BlockSpec((1, s, hid), lambda c, kk: (c, 0, 0)),      # partial per split
        scratch_shapes=[pltpu.VMEM((s, hid), jnp.float32)],                # per-core accumulator
    )

    partials = pl.pallas_call(
        _collapse_partial_kernel,
        out_shape=jax.ShapeDtypeStruct((nsplit, s, hid), jnp.float32),
        grid_spec=grid_spec,
        compiler_params=pltpu.CompilerParams(
            dimension_semantics=("parallel", "arbitrary"),   # core split axis / K reduction
            vmem_limit_bytes=vmem_limit,
        ),
        cost_estimate=cost,
    )(x_flat, w1p)

    # Tiny epilogue: everything fits in VMEM, single kernel invocation (no grid).
    out = pl.pallas_call(
        _epilogue_kernel,
        out_shape=jax.ShapeDtypeStruct((1, nout), jnp.float32),
    )(partials, b1f, w23, b23)
    return out  # [1, n_outputs] — same shape/semantics as the PyTorch forward output


def body_cll_avg_spatial_attn2(x, w1p, b1f, w23, b23, *, tk=None, nsplit=None):
    """x: [S, C, H, W] feature maps; (w1p, b1f, w23, b23) from prepare_params()."""
    s, c, hh, ww = x.shape
    k = c * hh * ww
    hid = w1p.shape[-1]
    itemsize = jnp.dtype(w1p.dtype).itemsize

    vmem_limit, default_nsplit = _generation_config()
    if tk is None:
        tk = _pick_tk(k, s, hid, itemsize, vmem_limit // 2)
    if k % tk != 0:
        raise ValueError(f"K={k} must be divisible by tk={tk}")
    nk = k // tk
    if nsplit is None:
        nsplit = default_nsplit
    if nk % nsplit != 0:
        nsplit = 1
    return _forward(x, w1p, b1f, w23, b23, tk=tk, nsplit=nsplit, vmem_limit=vmem_limit)


def _reference(x, w1, b1, w2, b2, wa, ba):
    xf = x.reshape(x.shape[0], -1).astype(jnp.float32)
    h = xf @ w1 + b1[None, :]
    x1 = h @ w2 + b2[None, :]
    attn = jax.nn.sigmoid(h @ wa + ba[None, :])
    return jnp.mean(x1 * attn, axis=0, keepdims=True)


if __name__ == "__main__":
    key = jax.random.PRNGKey(0)
    kx, k1, kb1, k2, kb2, k3, kb3 = jax.random.split(key, 7)

    # deterministic synthetic feature maps and parameters
    x = jax.random.normal(kx, (S, C, H, W), dtype=jnp.float32)
    K = C * H * W
    w1 = jax.random.normal(k1, (K, HID), dtype=jnp.float32) * (1.0 / jnp.sqrt(K))
    b1 = jax.random.normal(kb1, (HID,), dtype=jnp.float32) * 0.01
    w2 = jax.random.normal(k2, (HID, NOUT), dtype=jnp.float32) * (1.0 / jnp.sqrt(HID))
    b2 = jax.random.normal(kb2, (NOUT,), dtype=jnp.float32) * 0.01
    wa = jax.random.normal(k3, (HID, NOUT), dtype=jnp.float32) * (1.0 / jnp.sqrt(HID))
    ba = jax.random.normal(kb3, (NOUT,), dtype=jnp.float32) * 0.01

    ref = _reference(x, w1, b1, w2, b2, wa, ba)

    # f32 streaming, auto (VMEM-budget-derived) K tile.
    p32 = prepare_params(w1, b1, w2, b2, wa, ba, stream_dtype=jnp.float32)
    out = jax.block_until_ready(body_cll_avg_spatial_attn2(x, *p32))
    assert out.shape == (1, NOUT), out.shape
    assert jnp.allclose(out, ref, atol=1e-3, rtol=1e-3), (out, ref)

    # f32 streaming with forced multi-step K tiling + 2-way split axis: exercises the
    # v7x-style dual-core partial-accumulator path (correct-but-serial on 1-TC chips).
    out_split = jax.block_until_ready(body_cll_avg_spatial_attn2(x, *p32, tk=512, nsplit=2))
    assert out_split.shape == (1, NOUT), out_split.shape
    assert jnp.allclose(out_split, ref, atol=1e-3, rtol=1e-3), (out_split, ref)

    # Default bf16 streaming (halves the dominant x/w1 HBM stream at real shapes), f32 accum.
    pbf16 = prepare_params(w1, b1, w2, b2, wa, ba)
    out_bf16 = jax.block_until_ready(body_cll_avg_spatial_attn2(x, *pbf16))
    assert out_bf16.shape == (1, NOUT), out_bf16.shape
    assert jnp.allclose(out_bf16, ref, atol=1e-1, rtol=1e-1), (out_bf16, ref)

    print("KERNEL_OK")
</pallas_src>

<mosaic_0001>
module attributes {stable_mosaic.version = 11 : i64} {
  func.func @_collapse_partial_kernel(%arg0: i32, %arg1: i32, %arg2: memref<15x4096xf32, #tpu.memory_space<vmem>>, %arg3: memref<4096x32xf32, #tpu.memory_space<vmem>>, %arg4: memref<1x15x32xf32, #tpu.memory_space<vmem>>, %arg5: memref<15x32xf32, #tpu.memory_space<vmem>>) attributes {dimension_semantics = [#tpu.dimension_semantics<parallel>, #tpu.dimension_semantics<arbitrary>], iteration_bounds = array<i64: 1, 1>, scalar_prefetch = 0 : i64, scratch_operands = 1 : i64, tpu.core_type = #tpu.core_type<tc>, window_params = [{transform_indices = @transform_0, window_bounds = array<i64: 15, 4096>}, {transform_indices = @transform_1, window_bounds = array<i64: 4096, 32>}, {transform_indices = @transform_2, window_bounds = array<i64: 1, 15, 32>}]} {
    %c0_i32 = arith.constant 0 : i32
    %0 = arith.cmpi eq, %arg1, %c0_i32 : i32
    %1 = arith.extui %0 : i1 to i32
    %c0_i32_0 = arith.constant 0 : i32
    %2 = arith.cmpi ne, %1, %c0_i32_0 : i32
    scf.if %2 {
      %cst_10 = arith.constant 0.000000e+00 : f32
      %12 = vector.broadcast %cst_10 : f32 to vector<15x32xf32>
      %c0_11 = arith.constant 0 : index
      %c0_12 = arith.constant 0 : index
      %13 = vector.load %arg5[%c0_11, %c0_12] : memref<15x32xf32, #tpu.memory_space<vmem>>, vector<15x32xf32>
      tpu.vector_store %arg5[%c0_11, %c0_12], %12 {strides = array<i32>} : memref<15x32xf32, #tpu.memory_space<vmem>>, vector<15x32xf32>,
    } else {
    }
    %c0 = arith.constant 0 : index
    %c0_1 = arith.constant 0 : index
    %3 = vector.load %arg5[%c0, %c0_1] : memref<15x32xf32, #tpu.memory_space<vmem>>, vector<15x32xf32>
    %c0_2 = arith.constant 0 : index
    %c0_3 = arith.constant 0 : index
    %4 = vector.load %arg2[%c0_2, %c0_3] : memref<15x4096xf32, #tpu.memory_space<vmem>>, vector<15x4096xf32>
    %c0_4 = arith.constant 0 : index
    %c0_5 = arith.constant 0 : index
    %5 = vector.load %arg3[%c0_4, %c0_5] : memref<4096x32xf32, #tpu.memory_space<vmem>>, vector<4096x32xf32>
    %cst = arith.constant dense<0.000000e+00> : vector<15x32xf32>
    %6 = tpu.matmul %4, %5, %cst {dimension_numbers = #tpu.dot_dimension_numbers<[1], [0], [0], [1], [0, 0, 1, 1], [], []>} : vector<15x4096xf32>, vector<4096x32xf32>, vector<15x32xf32> -> vector<15x32xf32>
    %7 = arith.addf %3, %6 : vector<15x32xf32>
    %c0_6 = arith.constant 0 : index
    %c0_7 = arith.constant 0 : index
    %8 = vector.load %arg5[%c0_6, %c0_7] : memref<15x32xf32, #tpu.memory_space<vmem>>, vector<15x32xf32>
    tpu.vector_store %arg5[%c0_6, %c0_7], %7 {strides = array<i32>} : memref<15x32xf32, #tpu.memory_space<vmem>>, vector<15x32xf32>,
    %c0_i32_8 = arith.constant 0 : i32
    %9 = arith.cmpi eq, %arg1, %c0_i32_8 : i32
    %10 = arith.extui %9 : i1 to i32
    %c0_i32_9 = arith.constant 0 : i32
    %11 = arith.cmpi ne, %10, %c0_i32_9 : i32
    scf.if %11 {
      %c0_10 = arith.constant 0 : index
      %c0_11 = arith.constant 0 : index
      %12 = vector.load %arg5[%c0_10, %c0_11] : memref<15x32xf32, #tpu.memory_space<vmem>>, vector<15x32xf32>
      %13 = vector.shape_cast %12 : vector<15x32xf32> to vector<1x15x32xf32>
      %c0_12 = arith.constant 0 : index
      %c0_13 = arith.constant 0 : index
      %c0_14 = arith.constant 0 : index
      %14 = vector.load %arg4[%c0_12, %c0_13, %c0_14] : memref<1x15x32xf32, #tpu.memory_space<vmem>>, vector<1x15x32xf32>
      tpu.vector_store %arg4[%c0_12, %c0_13, %c0_14], %13 {strides = array<i32>} : memref<1x15x32xf32, #tpu.memory_space<vmem>>, vector<1x15x32xf32>,
    } else {
    }
    return
  }
  func.func @transform_0(%arg0: i32, %arg1: i32) -> (i32, i32) {
    %c1_i32 = arith.constant 1 : i32
    %0 = arith.muli %arg0, %c1_i32 : i32
    %1 = arith.addi %0, %arg1 : i32
    %c0_i32 = arith.constant 0 : i32
    %c0_i32_0 = arith.constant 0 : i32
    return %c0_i32, %1 : i32, i32
  }
  func.func @transform_1(%arg0: i32, %arg1: i32) -> (i32, i32) {
    %c1_i32 = arith.constant 1 : i32
    %0 = arith.muli %arg0, %c1_i32 : i32
    %1 = arith.addi %0, %arg1 : i32
    %c0_i32 = arith.constant 0 : i32
    %c0_i32_0 = arith.constant 0 : i32
    return %1, %c0_i32 : i32, i32
  }
  func.func @transform_2(%arg0: i32, %arg1: i32) -> (i32, i32, i32) {
    %c0_i32 = arith.constant 0 : i32
    %c0_i32_0 = arith.constant 0 : i32
    %c0_i32_1 = arith.constant 0 : i32
    return %arg0, %c0_i32, %c0_i32_0 : i32, i32, i32
  }
}

module attributes {stable_mosaic.version = 11 : i64} {
  func.func @_epilogue_kernel(%arg0: memref<1x15x32xf32, #tpu.memory_space<vmem>>, %arg1: memref<1x32xf32, #tpu.memory_space<vmem>>, %arg2: memref<32x32xf32, #tpu.memory_space<vmem>>, %arg3: memref<1x32xf32, #tpu.memory_space<vmem>>, %arg4: memref<1x16xf32, #tpu.memory_space<vmem>>) attributes {dimension_semantics = [], scalar_prefetch = 0 : i64, scratch_operands = 0 : i64, tpu.core_type = #tpu.core_type<tc>} {
    %c0 = arith.constant 0 : index
    %c0_0 = arith.constant 0 : index
    %c0_1 = arith.constant 0 : index
    %0 = vector.load %arg0[%c0, %c0_0, %c0_1] : memref<1x15x32xf32, #tpu.memory_space<vmem>>, vector<1x15x32xf32>
    %cst = arith.constant dense<0.000000e+00> : vector<15x32xf32>
    %1 = vector.multi_reduction <add>, %0, %cst [0] : vector<1x15x32xf32> to vector<15x32xf32>
    %c0_2 = arith.constant 0 : index
    %c0_3 = arith.constant 0 : index
    %2 = vector.load %arg1[%c0_2, %c0_3] : memref<1x32xf32, #tpu.memory_space<vmem>>, vector<1x32xf32>
    %3 = vector.broadcast %2 : vector<1x32xf32> to vector<15x32xf32>
    %4 = arith.addf %1, %3 : vector<15x32xf32>
    %c0_4 = arith.constant 0 : index
    %c0_5 = arith.constant 0 : index
    %5 = vector.load %arg2[%c0_4, %c0_5] : memref<32x32xf32, #tpu.memory_space<vmem>>, vector<32x32xf32>
    %cst_6 = arith.constant dense<0.000000e+00> : vector<15x32xf32>
    %6 = tpu.matmul %4, %5, %cst_6 {dimension_numbers = #tpu.dot_dimension_numbers<[1], [0], [0], [1], [0, 0, 1, 1], [], []>} : vector<15x32xf32>, vector<32x32xf32>, vector<15x32xf32> -> vector<15x32xf32>
    %c0_7 = arith.constant 0 : index
    %c0_8 = arith.constant 0 : index
    %7 = vector.load %arg3[%c0_7, %c0_8] : memref<1x32xf32, #tpu.memory_space<vmem>>, vector<1x32xf32>
    %8 = vector.broadcast %7 : vector<1x32xf32> to vector<15x32xf32>
    %9 = arith.addf %6, %8 : vector<15x32xf32>
    %10 = vector.extract_strided_slice %9 {offsets = [0, 0], sizes = [15, 16], strides = [1, 1]} : vector<15x32xf32> to vector<15x16xf32>
    %11 = vector.extract_strided_slice %9 {offsets = [0, 16], sizes = [15, 16], strides = [1, 1]} : vector<15x32xf32> to vector<15x16xf32>
    %12 = arith.negf %11 : vector<15x16xf32>
    %13 = math.exp %12 : vector<15x16xf32>
    %cst_9 = arith.constant 1.000000e+00 : f32
    %14 = vector.broadcast %cst_9 : f32 to vector<15x16xf32>
    %15 = arith.addf %14, %13 : vector<15x16xf32>
    %16 = arith.divf %14, %15 : vector<15x16xf32>
    %17 = arith.mulf %10, %16 : vector<15x16xf32>
    %cst_10 = arith.constant dense<0.000000e+00> : vector<16xf32>
    %18 = vector.multi_reduction <add>, %17, %cst_10 [0] : vector<15x16xf32> to vector<16xf32>
    %19 = vector.shape_cast %18 : vector<16xf32> to vector<1x16xf32>
    %cst_11 = arith.constant 0.0666666701 : f32
    %20 = vector.broadcast %cst_11 : f32 to vector<1x16xf32>
    %21 = arith.mulf %19, %20 : vector<1x16xf32>
    %c0_12 = arith.constant 0 : index
    %c0_13 = arith.constant 0 : index
    %22 = vector.load %arg4[%c0_12, %c0_13] : memref<1x16xf32, #tpu.memory_space<vmem>>, vector<1x16xf32>
    tpu.vector_store %arg4[%c0_12, %c0_13], %21 {strides = array<i32>} : memref<1x16xf32, #tpu.memory_space<vmem>>, vector<1x16xf32>,
    return
  }
}

</mosaic_0001>

<llo_original>
// kernel: _forward.3
$region0: #{_forward.3}
  #allocation0 [shape = 'u32[]', space=smem, size = 0x4, offset = 0x4, fixed_abs, tag = 'smem constant byte address 0x4 - core index']
  #allocation1 [shape = 'u32[72,128]{1,0:T(1,128)}', space=vmem, size = 0x9000, scoped, tag = 'internal scratch']
  %s0 = inlined_call_operand.vmem [shape: f32[1,15,32], index: 0, kind: input, shape index: {}]
  %s1 = inlined_call_operand.vmem [shape: f32[1,32], index: 1, kind: input, shape index: {}]
  %s2 = inlined_call_operand.vmem [shape: f32[32,32], index: 2, kind: input, shape index: {}]
  %s3 = inlined_call_operand.vmem [shape: f32[1,32], index: 3, kind: input, shape index: {}]
  %s4 = inlined_call_operand.hbm [shape: f32[1,16], index: 4, kind: output, shape index: {}]
  %s5 = sld [smem:[#allocation0]]
  $region26: #{_forward.3} parent=0
    _
  %s7 = ssub.s32 1, %s5
  %s8 = scalar_select 0, %s7, %s5
  $region1: #{_forward.3} parent=0
    #allocation2 [shape = 'u8[512]{0}', space=vmem, size = 0x400, scoped, tag = 'output window, operand 0, single buffered']
    #allocation3 [shape = 's32[1]{0}', space=sflag, size = 0x4, scoped, tag = 'scoped memory for _forward.3']
    %9 = vsyncpa [#allocation3], 0
    // Predicated region
    $region2: #{_forward.3} parent=1 // pred_check
      _
    $region3: #{_forward.3} parent=1 // pred_check_branch
      %11 = sbr.rel (0) target = $region5
    $region4: #{_forward.3} parent=1 // pred_region
      _
    $region5: #{_forward.3} parent=1 // pred_fallthru
      _
    // Predicated region
    $region6: #{_forward.3} parent=1 // pred_check
      _
    $region7: #{_forward.3} parent=1 // pred_check_branch
      %13 = sbr.rel (0) target = $region9
    $region8: #{_forward.3} parent=1 // pred_region
      _
    $region9: #{_forward.3} parent=1 // pred_fallthru
      _
    // Predicated region
    $region10: #{_forward.3} parent=1 // pred_check
      _
    $region11: #{_forward.3} parent=1 // pred_check_branch
      %15 = sbr.rel (0) target = $region13
    $region12: #{_forward.3} parent=1 // pred_region
      _
    $region13: #{_forward.3} parent=1 // pred_fallthru
      _
    // Predicated region
    $region14: #{_forward.3} parent=1 // pred_check
      _
    $region15: #{_forward.3} parent=1 // pred_check_branch
      %17 = sbr.rel (0) target = $region17
    $region16: #{_forward.3} parent=1 // pred_region
      _
    $region17: #{_forward.3} parent=1 // pred_fallthru
      _
    %v18 = vld [vmem:[%s0] sm:$0xff]
    %v19 = vld [vmem:[%s0 + $0x8] sm:$0x7f]
    %v20 = vadd.f32 %v18, 0.0
    %v21 = vadd.f32 %v19, 0.0
    %v22 = vld [vmem:[%s1] sm:$0x1]
    %v24 = vperm.slane %v22, 0
    %v26 = vadd.f32 %v20, %v24
    %v27 = vadd.f32 %v21, %v24
    %v28 = vld [vmem:[%s2] sm:$0xff]
    %v29 = vld [vmem:[%s2 + $0x8] sm:$0xff]
    %v30 = vld [vmem:[%s2 + $0x10] sm:$0xff]
    %v31 = vld [vmem:[%s2 + $0x18] sm:$0xff]
    %v32 = vld [vmem:[%s3] sm:$0x1]
    %v34 = vperm.slane %v32, 0
    %vm36 = vcmask 261120
    %v38 = vsel %vm36, %v26, 0
    %v41 = vsel %vm36, %v27, 0
    %43 = vmatpush.msra.mxu0 0.0
    %44 = vmatpush.msra.mxu0 0.0
    %45 = vmatpush.msra.mxu0 0.0
    %46 = vmatpush.msra.mxu0 0.0
    %47 = vmatpush.msra.mxu0 0.0
    %48 = vmatpush.msra.mxu0 0.0
    %49 = vmatpush.msra.mxu0 0.0
    %50 = vmatpush.msra.mxu0 0.0
    %51 = vmatpush.msra.mxu0 0.0
    %52 = vmatpush.msra.mxu0 0.0
    %53 = vmatpush.msra.mxu0 0.0
    %54 = vmatpush.msra.mxu0 0.0
    %55 = vmatpush.msra.mxu0 %v31
    %56 = vmatpush.msra.mxu0 %v30
    %57 = vmatpush.msra.mxu0 %v29
    %58 = vmatpush.msra.mxu0 %v28
    %59 = vmatmul.f32.gmra.mxu0 %v38
    %v60 = vpop.f32.mrf.mxu0
    %v61 = vadd.f32 %v34, %v60
    %62 = vmatmul.f32.gmra.mxu0 %v41
    %v63 = vpop.f32.mrf.mxu0
    %v64 = vadd.f32 %v34, %v63
    %65 = vdwg.mxu0
    %v66 = vxor.u32 %v61, 2147483648
    %v67 = vxor.u32 %v64, 2147483648
    %v68 = vmul.f32 %v66, 1.442695
    %v69 = vpow.pop %v68
    %v70 = vmul.f32 %v67, 1.442695
    %v71 = vpow.pop %v70
    %v72 = vadd.f32 %v69, 1.0
    %v73 = vadd.f32 %v71, 1.0
    %v74 = vrcp.pop %v72
    %v75 = vmul.f32 %v72, %v74
    %v76 = vsub.f32 1.0, %v75
    %v77 = vmul.f32 %v74, %v76
    %v78 = vadd.f32 %v74, %v77
    %vm79 = vweird.f32 %v72
    %vm80 = vweird.f32 %v74
    %vm81 = vmor %vm79, %vm80
    %v82 = vsel %vm81, %v74, %v78
    %v83 = vand.u32 2147483647, %v72
    %vm84 = vcmp.eq.f32.partialorder %v83, 8.507059e+37
    %v85 = vand.u32 %v72, 2147483648
    %v86 = vor.u32 1.1754944e-38, %v85
    %v87 = vsel %vm84, %v86, %v82
    %v88 = vmul.f32 1.0, %v87
    %v89 = vrcp.pop %v73
    %v90 = vmul.f32 %v73, %v89
    %v91 = vsub.f32 1.0, %v90
    %v92 = vmul.f32 %v89, %v91
    %v93 = vadd.f32 %v89, %v92
    %vm94 = vweird.f32 %v73
    %vm95 = vweird.f32 %v89
    %vm96 = vmor %vm94, %vm95
    %v97 = vsel %vm96, %v89, %v93
    %v98 = vand.u32 2147483647, %v73
    %vm99 = vcmp.eq.f32.partialorder %v98, 8.507059e+37
    %v100 = vand.u32 %v73, 2147483648
    %v101 = vor.u32 1.1754944e-38, %v100
    %v102 = vsel %vm99, %v101, %v97
    %v103 = vmul.f32 1.0, %v102
    %106 = vrot.lane.b32.xlu0 %v88, 112
    %v107 = vpop.permute.xlu0 %106
    %108 = vrot.lane.b32.xlu0 %v103, 112
    %v109 = vpop.permute.xlu0 %108
    %v112 = vmul.f32 %v61, %v107
    %v113 = vmul.f32 %v64, %v109
    %vm114 = vcmask 130048
    %v115 = vsel %vm114, %v112, 0.0
    %vm116 = vcmask 129024
    %v117 = vsel %vm116, %v113, 0.0
    %v118 = vadd.f32 %v115, %v117
    %v119 = vrot.slane %v118, 4
    %v120 = vadd.f32 %v118, %v119
    %v121 = vrot.slane %v120, 2
    %v122 = vadd.f32 %v120, %v121
    %v123 = vrot.slane %v122, 1
    %v124 = vadd.f32 %v122, %v123
    %v125 = vmul.f32 %v124, 0.06666667
    %vm126 = vcmask 122880
    %127 = vst.msk [vmem:[#allocation2] sm:$0x1] %vm126, %v125
    // Predicated region
    $region18: #{_forward.3} parent=1 // pred_check
      _
    $region19: #{_forward.3} parent=1 // pred_check_branch
      %129 = sbr.rel (0) target = $region21
    $region20: #{_forward.3} parent=1 // pred_region
      %131 = vsyncadd [#allocation3], 0
      %s133 = sshll.u32 [#allocation2], 4
      %s134 = int_to_ptr.vmem [resolvable:$true] %s133
      %s135 = sshll.u32 %s4, 4
      %s136 = int_to_ptr.hbm [resolvable:$true] %s135
      %138 = dma.vmem_to_hbm [thread:$0]  %s134, 16, %s136, [#allocation3]
    $region21: #{_forward.3} parent=1 // pred_fallthru
      _
    // Predicated region
    $region22: #{_forward.3} parent=1 // pred_check
      _
    $region23: #{_forward.3} parent=1 // pred_check_branch
      %140 = sbr.rel (0) target = $region25
    $region24: #{_forward.3} parent=1 // pred_region
      %142 = dma.done [#allocation3], 16
    $region25: #{_forward.3} parent=1 // pred_fallthru
      _
    %143 = vsyncpa [#allocation3], 1

// kernel: _forward.2
$region0: #{_forward.2}
  #allocation0 [shape = 'u32[]', space=smem, size = 0x4, offset = 0x4, fixed_abs, tag = 'smem constant byte address 0x4 - core index']
  #allocation1 [shape = 'u32[72,128]{1,0:T(1,128)}', space=vmem, size = 0x9000, scoped, tag = 'internal scratch']
  #allocation2 [shape = 'f32[15,32]{1,0:T(8,128)}', space=vmem, size = 0x2000, scoped, tag = 'scratch operand']
  %s0 = inlined_call_operand.vmem [shape: f32[15,4096], index: 0, kind: input, shape index: {}]
  %s1 = inlined_call_operand.vmem [shape: f32[4096,32], index: 1, kind: input, shape index: {}]
  %s2 = inlined_call_operand.vmem [shape: f32[1,15,32], index: 2, kind: output, shape index: {}]
  %s3 = sld [smem:[#allocation0]]
  $region26: #{_forward.2} parent=0
    _
  %s5 = ssub.s32 1, %s3
  %s6 = scalar_select 0, %s5, %s3
  // Predicated region
  $region2: #{_forward.2} parent=0 // pred_check
    _
  $region3: #{_forward.2} parent=0 // pred_check_branch
    %8 = sbr.rel (0) target = $region5
  $region4: #{_forward.2} parent=0 // pred_region
    %s9 = sadd.s32 0, 0
    %s10 = smul.u32 32, %s9
    %p11 = scmp.lt.s32.totalorder %s10, 31
    %s12 = scalar_select %p11, %s10, 31
    %s13 = smul.addr %s12, 8
    %s14 = scalar_lea.vmem %s0, %s13
    %s15 = sadd.s32 0, 0
    %s16 = smul.u32 32, %s15
  $region5: #{_forward.2} parent=0 // pred_fallthru
    _
  // Predicated region
  $region6: #{_forward.2} parent=0 // pred_check
    _
  $region7: #{_forward.2} parent=0 // pred_check_branch
    %18 = sbr.rel (0) target = $region9
  $region8: #{_forward.2} parent=0 // pred_region
    %s19 = sadd.s32 0, 0
    %s20 = smul.u32 512, %s19
    %p21 = scmp.lt.s32.totalorder %s20, 511
    %s22 = scalar_select %p21, %s20, 511
    %s23 = smul.addr %s22, 8
    %s24 = scalar_lea.vmem %s1, %s23
    %s25 = sadd.s32 0, 0
    %s26 = smul.u32 512, %s25
  $region9: #{_forward.2} parent=0 // pred_fallthru
    _
  %s27 = sadd.s32 0, 0
  %s28 = smul.u32 32, %s27
  %p29 = scmp.lt.s32.totalorder %s28, 31
  %s30 = scalar_select %p29, %s28, 31
  %s31 = smul.addr %s30, 8
  %s32 = scalar_lea.vmem %s0, %s31
  %s33 = sadd.s32 0, 0
  %s34 = smul.u32 512, %s33
  %p35 = scmp.lt.s32.totalorder %s34, 511
  %s36 = scalar_select %p35, %s34, 511
  %s37 = smul.addr %s36, 8
  %s38 = scalar_lea.vmem %s1, %s37
  %s39 = sadd.s32 0, 0
  %s40 = smul.u32 32, %s39
  %p41 = scmp.lt.s32.totalorder %s40, 31
  %s42 = scalar_select %p41, %s40, 31
  %s43 = smul.addr %s42, 8
  %s44 = scalar_lea.vmem %s0, %s43
  %s45 = sadd.s32 0, 0
  %s46 = smul.u32 32, %s45
  %s47 = sadd.s32 0, 0
  %s48 = smul.u32 512, %s47
  %p49 = scmp.lt.s32.totalorder %s48, 511
  %s50 = scalar_select %p49, %s48, 511
  %s51 = smul.addr %s50, 8
  %s52 = scalar_lea.vmem %s1, %s51
  %s53 = sadd.s32 0, 0
  %s54 = smul.u32 512, %s53
  %p55 = scmp.eq.s32.totalorder 0, 0
  // Predicated region
  $region10: #{_forward.2} parent=0 // pred_check
    %p56 = pneg %p55
  $region11: #{_forward.2} parent=0 // pred_check_branch
    %58 = sbr.rel (%p56) target = $region13
  $region12: #{_forward.2} parent=0 // pred_region
    %vm59 = vcmask 261120
    %60 = vst.msk [vmem:[#allocation2] sm:$0xff] %vm59, 0.0
    %vm61 = vcmask 260096
    %62 = vst.msk [vmem:[#allocation2 + $0x8] sm:$0x7f] %vm61, 0.0
  $region13: #{_forward.2} parent=0 // pred_fallthru
    _
  %v63 = vld [vmem:[#allocation2] sm:$0xff]
  %v64 = vld [vmem:[#allocation2 + $0x8] sm:$0x7f]
  %v65 = vld [vmem:[%s44] sm:$0xff]
  %v66 = vld [vmem:[%s44 + $0x8] sm:$0xff]
  %v67 = vld [vmem:[%s44 + $0x10] sm:$0xff]
  %v68 = vld [vmem:[%s44 + $0x18] sm:$0xff]
  %v69 = vld [vmem:[%s44 + $0x20] sm:$0xff]
  %v70 = vld [vmem:[%s44 + $0x28] sm:$0xff]
  %v71 = vld [vmem:[%s44 + $0x30] sm:$0xff]
  %v72 = vld [vmem:[%s44 + $0x38] sm:$0xff]
  %v73 = vld [vmem:[%s44 + $0x40] sm:$0xff]
  %v74 = vld [vmem:[%s44 + $0x48] sm:$0xff]
  %v75 = vld [vmem:[%s44 + $0x50] sm:$0xff]
  %v76 = vld [vmem:[%s44 + $0x58] sm:$0xff]
  %v77 = vld [vmem:[%s44 + $0x60] sm:$0xff]
  %v78 = vld [vmem:[%s44 + $0x68] sm:$0xff]
  %v79 = vld [vmem:[%s44 + $0x70] sm:$0xff]
  %v80 = vld [vmem:[%s44 + $0x78] sm:$0xff]
  %v81 = vld [vmem:[%s44 + $0x80] sm:$0xff]
  %v82 = vld [vmem:[%s44 + $0x88] sm:$0xff]
  %v83 = vld [vmem:[%s44 + $0x90] sm:$0xff]
  %v84 = vld [vmem:[%s44 + $0x98] sm:$0xff]
  %v85 = vld [vmem:[%s44 + $0xa0] sm:$0xff]
  %v86 = vld [vmem:[%s44 + $0xa8] sm:$0xff]
  %v87 = vld [vmem:[%s44 + $0xb0] sm:$0xff]
  %v88 = vld [vmem:[%s44 + $0xb8] sm:$0xff]
  %v89 = vld [vmem:[%s44 + $0xc0] sm:$0xff]
  %v90 = vld [vmem:[%s44 + $0xc8] sm:$0xff]
  %v91 = vld [vmem:[%s44 + $0xd0] sm:$0xff]
  %v92 = vld [vmem:[%s44 + $0xd8] sm:$0xff]
  %v93 = vld [vmem:[%s44 + $0xe0] sm:$0xff]
  %v94 = vld [vmem:[%s44 + $0xe8] sm:$0xff]
  %v95 = vld [vmem:[%s44 + $0xf0] sm:$0xff]
  %v96 = vld [vmem:[%s44 + $0xf8] sm:$0xff]
  %v97 = vld [vmem:[%s44 + $0x100] sm:$0x7f]
  %v98 = vld [vmem:[%s44 + $0x108] sm:$0x7f]
  %v99 = vld [vmem:[%s44 + $0x110] sm:$0x7f]
  %v100 = vld [vmem:[%s44 + $0x118] sm:$0x7f]
  %v101 = vld [vmem:[%s44 + $0x120] sm:$0x7f]
  %v102 = vld [vmem:[%s44 + $0x128] sm:$0x7f]
  %v103 = vld [vmem:[%s44 + $0x130] sm:$0x7f]
  %v104 = vld [vmem:[%s44 + $0x138] sm:$0x7f]
  %v105 = vld [vmem:[%s44 + $0x140] sm:$0x7f]
  %v106 = vld [vmem:[%s44 + $0x148] sm:$0x7f]
  %v107 = vld [vmem:[%s44 + $0x150] sm:$0x7f]
  %v108 = vld [vmem:[%s44 + $0x158] sm:$0x7f]
  %v109 = vld [vmem:[%s44 + $0x160] sm:$0x7f]
  %v110 = vld [vmem:[%s44 + $0x168] sm:$0x7f]
  %v111 = vld [vmem:[%s44 + $0x170] sm:$0x7f]
  %v112 = vld [vmem:[%s44 + $0x178] sm:$0x7f]
  %v113 = vld [vmem:[%s44 + $0x180] sm:$0x7f]
  %v114 = vld [vmem:[%s44 + $0x188] sm:$0x7f]
  %v115 = vld [vmem:[%s44 + $0x190] sm:$0x7f]
  %v116 = vld [vmem:[%s44 + $0x198] sm:$0x7f]
  %v117 = vld [vmem:[%s44 + $0x1a0] sm:$0x7f]
  %v118 = vld [vmem:[%s44 + $0x1a8] sm:$0x7f]
  %v119 = vld [vmem:[%s44 + $0x1b0] sm:$0x7f]
  %v120 = vld [vmem:[%s44 + $0x1b8] sm:$0x7f]
  %v121 = vld [vmem:[%s44 + $0x1c0] sm:$0x7f]
  %v122 = vld [vmem:[%s44 + $0x1c8] sm:$0x7f]
  %v123 = vld [vmem:[%s44 + $0x1d0] sm:$0x7f]
  %v124 = vld [vmem:[%s44 + $0x1d8] sm:$0x7f]
  %v125 = vld [vmem:[%s44 + $0x1e0] sm:$0x7f]
  %v126 = vld [vmem:[%s44 + $0x1e8] sm:$0x7f]
  %v127 = vld [vmem:[%s44 + $0x1f0] sm:$0x7f]
  %v128 = vld [vmem:[%s44 + $0x1f8] sm:$0x7f]
  %v129 = vld [vmem:[%s52] sm:$0xff]
  %v130 = vld [vmem:[%s52 + $0x8] sm:$0xff]
  %v131 = vld [vmem:[%s52 + $0x10] sm:$0xff]
  %v132 = vld [vmem:[%s52 + $0x18] sm:$0xff]
  %v133 = vld [vmem:[%s52 + $0x20] sm:$0xff]
  %v134 = vld [vmem:[%s52 + $0x28] sm:$0xff]
  %v135 = vld [vmem:[%s52 + $0x30] sm:$0xff]
  %v136 = vld [vmem:[%s52 + $0x38] sm:$0xff]
  %v137 = vld [vmem:[%s52 + $0x40] sm:$0xff]
  %v138 = vld [vmem:[%s52 + $0x48] sm:$0xff]
  %v139 = vld [vmem:[%s52 + $0x50] sm:$0xff]
  %v140 = vld [vmem:[%s52 + $0x58] sm:$0xff]
  %v141 = vld [vmem:[%s52 + $0x60] sm:$0xff]
  %v142 = vld [vmem:[%s52 + $0x68] sm:$0xff]
  %v143 = vld [vmem:[%s52 + $0x70] sm:$0xff]
  %v144 = vld [vmem:[%s52 + $0x78] sm:$0xff]
  %v145 = vld [vmem:[%s52 + $0x80] sm:$0xff]
  %v146 = vld [vmem:[%s52 + $0x88] sm:$0xff]
  %v147 = vld [vmem:[%s52 + $0x90] sm:$0xff]
  %v148 = vld [vmem:[%s52 + $0x98] sm:$0xff]
  %v149 = vld [vmem:[%s52 + $0xa0] sm:$0xff]
  %v150 = vld [vmem:[%s52 + $0xa8] sm:$0xff]
  %v151 = vld [vmem:[%s52 + $0xb0] sm:$0xff]
  %v152 = vld [vmem:[%s52 + $0xb8] sm:$0xff]
  %v153 = vld [vmem:[%s52 + $0xc0] sm:$0xff]
  %v154 = vld [vmem:[%s52 + $0xc8] sm:$0xff]
  %v155 = vld [vmem:[%s52 + $0xd0] sm:$0xff]
  %v156 = vld [vmem:[%s52 + $0xd8] sm:$0xff]
  %v157 = vld [vmem:[%s52 + $0xe0] sm:$0xff]
  %v158 = vld [vmem:[%s52 + $0xe8] sm:$0xff]
  %v159 = vld [vmem:[%s52 + $0xf0] sm:$0xff]
  %v160 = vld [vmem:[%s52 + $0xf8] sm:$0xff]
  %v161 = vld [vmem:[%s52 + $0x100] sm:$0xff]
  %v162 = vld [vmem:[%s52 + $0x108] sm:$0xff]
  %v163 = vld [vmem:[%s52 + $0x110] sm:$0xff]
  %v164 = vld [vmem:[%s52 + $0x118] sm:$0xff]
  %v165 = vld [vmem:[%s52 + $0x120] sm:$0xff]
  %v166 = vld [vmem:[%s52 + $0x128] sm:$0xff]
  %v167 = vld [vmem:[%s52 + $0x130] sm:$0xff]
  %v168 = vld [vmem:[%s52 + $0x138] sm:$0xff]
  %v169 = vld [vmem:[%s52 + $0x140] sm:$0xff]
  %v170 = vld [vmem:[%s52 + $0x148] sm:$0xff]
  %v171 = vld [vmem:[%s52 + $0x150] sm:$0xff]
  %v172 = vld [vmem:[%s52 + $0x158] sm:$0xff]
  %v173 = vld [vmem:[%s52 + $0x160] sm:$0xff]
  %v174 = vld [vmem:[%s52 + $0x168] sm:$0xff]
  %v175 = vld [vmem:[%s52 + $0x170] sm:$0xff]
  %v176 = vld [vmem:[%s52 + $0x178] sm:$0xff]
  %v177 = vld [vmem:[%s52 + $0x180] sm:$0xff]
  %v178 = vld [vmem:[%s52 + $0x188] sm:$0xff]
  %v179 = vld [vmem:[%s52 + $0x190] sm:$0xff]
  %v180 = vld [vmem:[%s52 + $0x198] sm:$0xff]
  %v181 = vld [vmem:[%s52 + $0x1a0] sm:$0xff]
  %v182 = vld [vmem:[%s52 + $0x1a8] sm:$0xff]
  %v183 = vld [vmem:[%s52 + $0x1b0] sm:$0xff]
  %v184 = vld [vmem:[%s52 + $0x1b8] sm:$0xff]
  %v185 = vld [vmem:[%s52 + $0x1c0] sm:$0xff]
  %v186 = vld [vmem:[%s52 + $0x1c8] sm:$0xff]
  %v187 = vld [vmem:[%s52 + $0x1d0] sm:$0xff]
  %v188 = vld [vmem:[%s52 + $0x1d8] sm:$0xff]
  %v189 = vld [vmem:[%s52 + $0x1e0] sm:$0xff]
  %v190 = vld [vmem:[%s52 + $0x1e8] sm:$0xff]
  %v191 = vld [vmem:[%s52 + $0x1f0] sm:$0xff]
  %v192 = vld [vmem:[%s52 + $0x1f8] sm:$0xff]
  %v193 = vld [vmem:[%s52 + $0x200] sm:$0xff]
  %v194 = vld [vmem:[%s52 + $0x208] sm:$0xff]
  %v195 = vld [vmem:[%s52 + $0x210] sm:$0xff]
  %v196 = vld [vmem:[%s52 + $0x218] sm:$0xff]
  %v197 = vld [vmem:[%s52 + $0x220] sm:$0xff]
  %v198 = vld [vmem:[%s52 + $0x228] sm:$0xff]
  %v199 = vld [vmem:[%s52 + $0x230] sm:$0xff]
  %v200 = vld [vmem:[%s52 + $0x238] sm:$0xff]
  %v201 = vld [vmem:[%s52 + $0x240] sm:$0xff]
  %v202 = vld [vmem:[%s52 + $0x248] sm:$0xff]
  %v203 = vld [vmem:[%s52 + $0x250] sm:$0xff]
  %v204 = vld [vmem:[%s52 + $0x258] sm:$0xff]
  %v205 = vld [vmem:[%s52 + $0x260] sm:$0xff]
  %v206 = vld [vmem:[%s52 + $0x268] sm:$0xff]
  %v207 = vld [vmem:[%s52 + $0x270] sm:$0xff]
  %v208 = vld [vmem:[%s52 + $0x278] sm:$0xff]
  %v209 = vld [vmem:[%s52 + $0x280] sm:$0xff]
  %v210 = vld [vmem:[%s52 + $0x288] sm:$0xff]
  %v211 = vld [vmem:[%s52 + $0x290] sm:$0xff]
  %v212 = vld [vmem:[%s52 + $0x298] sm:$0xff]
  %v213 = vld [vmem:[%s52 + $0x2a0] sm:$0xff]
  %v214 = vld [vmem:[%s52 + $0x2a8] sm:$0xff]
  %v215 = vld [vmem:[%s52 + $0x2b0] sm:$0xff]
  %v216 = vld [vmem:[%s52 + $0x2b8] sm:$0xff]
  %v217 = vld [vmem:[%s52 + $0x2c0] sm:$0xff]
  %v218 = vld [vmem:[%s52 + $0x2c8] sm:$0xff]
  %v219 = vld [vmem:[%s52 + $0x2d0] sm:$0xff]
  %v220 = vld [vmem:[%s52 + $0x2d8] sm:$0xff]
  %v221 = vld [vmem:[%s52 + $0x2e0] sm:$0xff]
  %v222 = vld [vmem:[%s52 + $0x2e8] sm:$0xff]
  %v223 = vld [vmem:[%s52 + $0x2f0] sm:$0xff]
  %v224 = vld [vmem:[%s52 + $0x2f8] sm:$0xff]
  %v225 = vld [vmem:[%s52 + $0x300] sm:$0xff]
  %v226 = vld [vmem:[%s52 + $0x308] sm:$0xff]
  %v227 = vld [vmem:[%s52 + $0x310] sm:$0xff]
  %v228 = vld [vmem:[%s52 + $0x318] sm:$0xff]
  %v229 = vld [vmem:[%s52 + $0x320] sm:$0xff]
  %v230 = vld [vmem:[%s52 + $0x328] sm:$0xff]
  %v231 = vld [vmem:[%s52 + $0x330] sm:$0xff]
  %v232 = vld [vmem:[%s52 + $0x338] sm:$0xff]
  %v233 = vld [vmem:[%s52 + $0x340] sm:$0xff]
  %v234 = vld [vmem:[%s52 + $0x348] sm:$0xff]
  %v235 = vld [vmem:[%s52 + $0x350] sm:$0xff]
  %v236 = vld [vmem:[%s52 + $0x358] sm:$0xff]
  %v237 = vld [vmem:[%s52 + $0x360] sm:$0xff]
  %v238 = vld [vmem:[%s52 + $0x368] sm:$0xff]
  %v239 = vld [vmem:[%s52 + $0x370] sm:$0xff]
  %v240 = vld [vmem:[%s52 + $0x378] sm:$0xff]
  %v241 = vld [vmem:[%s52 + $0x380] sm:$0xff]
  %v242 = vld [vmem:[%s52 + $0x388] sm:$0xff]
  %v243 = vld [vmem:[%s52 + $0x390] sm:$0xff]
  %v244 = vld [vmem:[%s52 + $0x398] sm:$0xff]
  %v245 = vld [vmem:[%s52 + $0x3a0] sm:$0xff]
  %v246 = vld [vmem:[%s52 + $0x3a8] sm:$0xff]
  %v247 = vld [vmem:[%s52 + $0x3b0] sm:$0xff]
  %v248 = vld [vmem:[%s52 + $0x3b8] sm:$0xff]
  %v249 = vld [vmem:[%s52 + $0x3c0] sm:$0xff]
  %v250 = vld [vmem:[%s52 + $0x3c8] sm:$0xff]
  %v251 = vld [vmem:[%s52 + $0x3d0] sm:$0xff]
  %v252 = vld [vmem:[%s52 + $0x3d8] sm:$0xff]
  %v253 = vld [vmem:[%s52 + $0x3e0] sm:$0xff]
  %v254 = vld [vmem:[%s52 + $0x3e8] sm:$0xff]
  %v255 = vld [vmem:[%s52 + $0x3f0] sm:$0xff]
  %v256 = vld [vmem:[%s52 + $0x3f8] sm:$0xff]
  %v257 = vld [vmem:[%s52 + $0x400] sm:$0xff]
  %v258 = vld [vmem:[%s52 + $0x408] sm:$0xff]
  %v259 = vld [vmem:[%s52 + $0x410] sm:$0xff]
  %v260 = vld [vmem:[%s52 + $0x418] sm:$0xff]
  %v261 = vld [vmem:[%s52 + $0x420] sm:$0xff]
  %v262 = vld [vmem:[%s52 + $0x428] sm:$0xff]
  %v263 = vld [vmem:[%s52 + $0x430] sm:$0xff]
  %v264 = vld [vmem:[%s52 + $0x438] sm:$0xff]
  %v265 = vld [vmem:[%s52 + $0x440] sm:$0xff]
  %v266 = vld [vmem:[%s52 + $0x448] sm:$0xff]
  %v267 = vld [vmem:[%s52 + $0x450] sm:$0xff]
  %v268 = vld [vmem:[%s52 + $0x458] sm:$0xff]
  %v269 = vld [vmem:[%s52 + $0x460] sm:$0xff]
  %v270 = vld [vmem:[%s52 + $0x468] sm:$0xff]
  %v271 = vld [vmem:[%s52 + $0x470] sm:$0xff]
  %v272 = vld [vmem:[%s52 + $0x478] sm:$0xff]
  %v273 = vld [vmem:[%s52 + $0x480] sm:$0xff]
  %v274 = vld [vmem:[%s52 + $0x488] sm:$0xff]
  %v275 = vld [vmem:[%s52 + $0x490] sm:$0xff]
  %v276 = vld [vmem:[%s52 + $0x498] sm:$0xff]
  %v277 = vld [vmem:[%s52 + $0x4a0] sm:$0xff]
  %v278 = vld [vmem:[%s52 + $0x4a8] sm:$0xff]
  %v279 = vld [vmem:[%s52 + $0x4b0] sm:$0xff]
  %v280 = vld [vmem:[%s52 + $0x4b8] sm:$0xff]
  %v281 = vld [vmem:[%s52 + $0x4c0] sm:$0xff]
  %v282 = vld [vmem:[%s52 + $0x4c8] sm:$0xff]
  %v283 = vld [vmem:[%s52 + $0x4d0] sm:$0xff]
  %v284 = vld [vmem:[%s52 + $0x4d8] sm:$0xff]
  %v285 = vld [vmem:[%s52 + $0x4e0] sm:$0xff]
  %v286 = vld [vmem:[%s52 + $0x4e8] sm:$0xff]
  %v287 = vld [vmem:[%s52 + $0x4f0] sm:$0xff]
  %v288 = vld [vmem:[%s52 + $0x4f8] sm:$0xff]
  %v289 = vld [vmem:[%s52 + $0x500] sm:$0xff]
  %v290 = vld [vmem:[%s52 + $0x508] sm:$0xff]
  %v291 = vld [vmem:[%s52 + $0x510] sm:$0xff]
  %v292 = vld [vmem:[%s52 + $0x518] sm:$0xff]
  %v293 = vld [vmem:[%s52 + $0x520] sm:$0xff]
  %v294 = vld [vmem:[%s52 + $0x528] sm:$0xff]
  %v295 = vld [vmem:[%s52 + $0x530] sm:$0xff]
  %v296 = vld [vmem:[%s52 + $0x538] sm:$0xff]
  %v297 = vld [vmem:[%s52 + $0x540] sm:$0xff]
  %v298 = vld [vmem:[%s52 + $0x548] sm:$0xff]
  %v299 = vld [vmem:[%s52 + $0x550] sm:$0xff]
  %v300 = vld [vmem:[%s52 + $0x558] sm:$0xff]
  %v301 = vld [vmem:[%s52 + $0x560] sm:$0xff]
  %v302 = vld [vmem:[%s52 + $0x568] sm:$0xff]
  %v303 = vld [vmem:[%s52 + $0x570] sm:$0xff]
  %v304 = vld [vmem:[%s52 + $0x578] sm:$0xff]
  %v305 = vld [vmem:[%s52 + $0x580] sm:$0xff]
  %v306 = vld [vmem:[%s52 + $0x588] sm:$0xff]
  %v307 = vld [vmem:[%s52 + $0x590] sm:$0xff]
  %v308 = vld [vmem:[%s52 + $0x598] sm:$0xff]
  %v309 = vld [vmem:[%s52 + $0x5a0] sm:$0xff]
  %v310 = vld [vmem:[%s52 + $0x5a8] sm:$0xff]
  %v311 = vld [vmem:[%s52 + $0x5b0] sm:$0xff]
  %v312 = vld [vmem:[%s52 + $0x5b8] sm:$0xff]
  %v313 = vld [vmem:[%s52 + $0x5c0] sm:$0xff]
  %v314 = vld [vmem:[%s52 + $0x5c8] sm:$0xff]
  %v315 = vld [vmem:[%s52 + $0x5d0] sm:$0xff]
  %v316 = vld [vmem:[%s52 + $0x5d8] sm:$0xff]
  %v317 = vld [vmem:[%s52 + $0x5e0] sm:$0xff]
  %v318 = vld [vmem:[%s52 + $0x5e8] sm:$0xff]
  %v319 = vld [vmem:[%s52 + $0x5f0] sm:$0xff]
  %v320 = vld [vmem:[%s52 + $0x5f8] sm:$0xff]
  %v321 = vld [vmem:[%s52 + $0x600] sm:$0xff]
  %v322 = vld [vmem:[%s52 + $0x608] sm:$0xff]
  %v323 = vld [vmem:[%s52 + $0x610] sm:$0xff]
  %v324 = vld [vmem:[%s52 + $0x618] sm:$0xff]
  %v325 = vld [vmem:[%s52 + $0x620] sm:$0xff]
  %v326 = vld [vmem:[%s52 + $0x628] sm:$0xff]
  %v327 = vld [vmem:[%s52 + $0x630] sm:$0xff]
  %v328 = vld [vmem:[%s52 + $0x638] sm:$0xff]
  %v329 = vld [vmem:[%s52 + $0x640] sm:$0xff]
  %v330 = vld [vmem:[%s52 + $0x648] sm:$0xff]
  %v331 = vld [vmem:[%s52 + $0x650] sm:$0xff]
  %v332 = vld [vmem:[%s52 + $0x658] sm:$0xff]
  %v333 = vld [vmem:[%s52 + $0x660] sm:$0xff]
  %v334 = vld [vmem:[%s52 + $0x668] sm:$0xff]
  %v335 = vld [vmem:[%s52 + $0x670] sm:$0xff]
  %v336 = vld [vmem:[%s52 + $0x678] sm:$0xff]
  %v337 = vld [vmem:[%s52 + $0x680] sm:$0xff]
  %v338 = vld [vmem:[%s52 + $0x688] sm:$0xff]
  %v339 = vld [vmem:[%s52 + $0x690] sm:$0xff]
  %v340 = vld [vmem:[%s52 + $0x698] sm:$0xff]
  %v341 = vld [vmem:[%s52 + $0x6a0] sm:$0xff]
  %v342 = vld [vmem:[%s52 + $0x6a8] sm:$0xff]
  %v343 = vld [vmem:[%s52 + $0x6b0] sm:$0xff]
  %v344 = vld [vmem:[%s52 + $0x6b8] sm:$0xff]
  %v345 = vld [vmem:[%s52 + $0x6c0] sm:$0xff]
  %v346 = vld [vmem:[%s52 + $0x6c8] sm:$0xff]
  %v347 = vld [vmem:[%s52 + $0x6d0] sm:$0xff]
  %v348 = vld [vmem:[%s52 + $0x6d8] sm:$0xff]
  %v349 = vld [vmem:[%s52 + $0x6e0] sm:$0xff]
  %v350 = vld [vmem:[%s52 + $0x6e8] sm:$0xff]
  %v351 = vld [vmem:[%s52 + $0x6f0] sm:$0xff]
  %v352 = vld [vmem:[%s52 + $0x6f8] sm:$0xff]
  %v353 = vld [vmem:[%s52 + $0x700] sm:$0xff]
  %v354 = vld [vmem:[%s52 + $0x708] sm:$0xff]
  %v355 = vld [vmem:[%s52 + $0x710] sm:$0xff]
  %v356 = vld [vmem:[%s52 + $0x718] sm:$0xff]
  %v357 = vld [vmem:[%s52 + $0x720] sm:$0xff]
  %v358 = vld [vmem:[%s52 + $0x728] sm:$0xff]
  %v359 = vld [vmem:[%s52 + $0x730] sm:$0xff]
  %v360 = vld [vmem:[%s52 + $0x738] sm:$0xff]
  %v361 = vld [vmem:[%s52 + $0x740] sm:$0xff]
  %v362 = vld [vmem:[%s52 + $0x748] sm:$0xff]
  %v363 = vld [vmem:[%s52 + $0x750] sm:$0xff]
  %v364 = vld [vmem:[%s52 + $0x758] sm:$0xff]
  %v365 = vld [vmem:[%s52 + $0x760] sm:$0xff]
  %v366 = vld [vmem:[%s52 + $0x768] sm:$0xff]
  %v367 = vld [vmem:[%s52 + $0x770] sm:$0xff]
  %v368 = vld [vmem:[%s52 + $0x778] sm:$0xff]
  %v369 = vld [vmem:[%s52 + $0x780] sm:$0xff]
  %v370 = vld [vmem:[%s52 + $0x788] sm:$0xff]
  %v371 = vld [vmem:[%s52 + $0x790] sm:$0xff]
  %v372 = vld [vmem:[%s52 + $0x798] sm:$0xff]
  %v373 = vld [vmem:[%s52 + $0x7a0] sm:$0xff]
  %v374 = vld [vmem:[%s52 + $0x7a8] sm:$0xff]
  %v375 = vld [vmem:[%s52 + $0x7b0] sm:$0xff]
  %v376 = vld [vmem:[%s52 + $0x7b8] sm:$0xff]
  %v377 = vld [vmem:[%s52 + $0x7c0] sm:$0xff]
  %v378 = vld [vmem:[%s52 + $0x7c8] sm:$0xff]
  %v379 = vld [vmem:[%s52 + $0x7d0] sm:$0xff]
  %v380 = vld [vmem:[%s52 + $0x7d8] sm:$0xff]
  %v381 = vld [vmem:[%s52 + $0x7e0] sm:$0xff]
  %v382 = vld [vmem:[%s52 + $0x7e8] sm:$0xff]
  %v383 = vld [vmem:[%s52 + $0x7f0] sm:$0xff]
  %v384 = vld [vmem:[%s52 + $0x7f8] sm:$0xff]
  %v385 = vld [vmem:[%s52 + $0x800] sm:$0xff]
  %v386 = vld [vmem:[%s52 + $0x808] sm:$0xff]
  %v387 = vld [vmem:[%s52 + $0x810] sm:$0xff]
  %v388 = vld [vmem:[%s52 + $0x818] sm:$0xff]
  %v389 = vld [vmem:[%s52 + $0x820] sm:$0xff]
  %v390 = vld [vmem:[%s52 + $0x828] sm:$0xff]
  %v391 = vld [vmem:[%s52 + $0x830] sm:$0xff]
  %v392 = vld [vmem:[%s52 + $0x838] sm:$0xff]
  %v393 = vld [vmem:[%s52 + $0x840] sm:$0xff]
  %v394 = vld [vmem:[%s52 + $0x848] sm:$0xff]
  %v395 = vld [vmem:[%s52 + $0x850] sm:$0xff]
  %v396 = vld [vmem:[%s52 + $0x858] sm:$0xff]
  %v397 = vld [vmem:[%s52 + $0x860] sm:$0xff]
  %v398 = vld [vmem:[%s52 + $0x868] sm:$0xff]
  %v399 = vld [vmem:[%s52 + $0x870] sm:$0xff]
  %v400 = vld [vmem:[%s52 + $0x878] sm:$0xff]
  %v401 = vld [vmem:[%s52 + $0x880] sm:$0xff]
  %v402 = vld [vmem:[%s52 + $0x888] sm:$0xff]
  %v403 = vld [vmem:[%s52 + $0x890] sm:$0xff]
  %v404 = vld [vmem:[%s52 + $0x898] sm:$0xff]
  %v405 = vld [vmem:[%s52 + $0x8a0] sm:$0xff]
  %v406 = vld [vmem:[%s52 + $0x8a8] sm:$0xff]
  %v407 = vld [vmem:[%s52 + $0x8b0] sm:$0xff]
  %v408 = vld [vmem:[%s52 + $0x8b8] sm:$0xff]
  %v409 = vld [vmem:[%s52 + $0x8c0] sm:$0xff]
  %v410 = vld [vmem:[%s52 + $0x8c8] sm:$0xff]
  %v411 = vld [vmem:[%s52 + $0x8d0] sm:$0xff]
  %v412 = vld [vmem:[%s52 + $0x8d8] sm:$0xff]
  %v413 = vld [vmem:[%s52 + $0x8e0] sm:$0xff]
  %v414 = vld [vmem:[%s52 + $0x8e8] sm:$0xff]
  %v415 = vld [vmem:[%s52 + $0x8f0] sm:$0xff]
  %v416 = vld [vmem:[%s52 + $0x8f8] sm:$0xff]
  %v417 = vld [vmem:[%s52 + $0x900] sm:$0xff]
  %v418 = vld [vmem:[%s52 + $0x908] sm:$0xff]
  %v419 = vld [vmem:[%s52 + $0x910] sm:$0xff]
  %v420 = vld [vmem:[%s52 + $0x918] sm:$0xff]
  %v421 = vld [vmem:[%s52 + $0x920] sm:$0xff]
  %v422 = vld [vmem:[%s52 + $0x928] sm:$0xff]
  %v423 = vld [vmem:[%s52 + $0x930] sm:$0xff]
  %v424 = vld [vmem:[%s52 + $0x938] sm:$0xff]
  %v425 = vld [vmem:[%s52 + $0x940] sm:$0xff]
  %v426 = vld [vmem:[%s52 + $0x948] sm:$0xff]
  %v427 = vld [vmem:[%s52 + $0x950] sm:$0xff]
  %v428 = vld [vmem:[%s52 + $0x958] sm:$0xff]
  %v429 = vld [vmem:[%s52 + $0x960] sm:$0xff]
  %v430 = vld [vmem:[%s52 + $0x968] sm:$0xff]
  %v431 = vld [vmem:[%s52 + $0x970] sm:$0xff]
  %v432 = vld [vmem:[%s52 + $0x978] sm:$0xff]
  %v433 = vld [vmem:[%s52 + $0x980] sm:$0xff]
  %v434 = vld [vmem:[%s52 + $0x988] sm:$0xff]
  %v435 = vld [vmem:[%s52 + $0x990] sm:$0xff]
  %v436 = vld [vmem:[%s52 + $0x998] sm:$0xff]
  %v437 = vld [vmem:[%s52 + $0x9a0] sm:$0xff]
  %v438 = vld [vmem:[%s52 + $0x9a8] sm:$0xff]
  %v439 = vld [vmem:[%s52 + $0x9b0] sm:$0xff]
  %v440 = vld [vmem:[%s52 + $0x9b8] sm:$0xff]
  %v441 = vld [vmem:[%s52 + $0x9c0] sm:$0xff]
  %v442 = vld [vmem:[%s52 + $0x9c8] sm:$0xff]
  %v443 = vld [vmem:[%s52 + $0x9d0] sm:$0xff]
  %v444 = vld [vmem:[%s52 + $0x9d8] sm:$0xff]
  %v445 = vld [vmem:[%s52 + $0x9e0] sm:$0xff]
  %v446 = vld [vmem:[%s52 + $0x9e8] sm:$0xff]
  %v447 = vld [vmem:[%s52 + $0x9f0] sm:$0xff]
  %v448 = vld [vmem:[%s52 + $0x9f8] sm:$0xff]
  %v449 = vld [vmem:[%s52 + $0xa00] sm:$0xff]
  %v450 = vld [vmem:[%s52 + $0xa08] sm:$0xff]
  %v451 = vld [vmem:[%s52 + $0xa10] sm:$0xff]
  %v452 = vld [vmem:[%s52 + $0xa18] sm:$0xff]
  %v453 = vld [vmem:[%s52 + $0xa20] sm:$0xff]
  %v454 = vld [vmem:[%s52 + $0xa28] sm:$0xff]
  %v455 = vld [vmem:[%s52 + $0xa30] sm:$0xff]
  %v456 = vld [vmem:[%s52 + $0xa38] sm:$0xff]
  %v457 = vld [vmem:[%s52 + $0xa40] sm:$0xff]
  %v458 = vld [vmem:[%s52 + $0xa48] sm:$0xff]
  %v459 = vld [vmem:[%s52 + $0xa50] sm:$0xff]
  %v460 = vld [vmem:[%s52 + $0xa58] sm:$0xff]
  %v461 = vld [vmem:[%s52 + $0xa60] sm:$0xff]
  %v462 = vld [vmem:[%s52 + $0xa68] sm:$0xff]
  %v463 = vld [vmem:[%s52 + $0xa70] sm:$0xff]
  %v464 = vld [vmem:[%s52 + $0xa78] sm:$0xff]
  %v465 = vld [vmem:[%s52 + $0xa80] sm:$0xff]
  %v466 = vld [vmem:[%s52 + $0xa88] sm:$0xff]
  %v467 = vld [vmem:[%s52 + $0xa90] sm:$0xff]
  %v468 = vld [vmem:[%s52 + $0xa98] sm:$0xff]
  %v469 = vld [vmem:[%s52 + $0xaa0] sm:$0xff]
  %v470 = vld [vmem:[%s52 + $0xaa8] sm:$0xff]
  %v471 = vld [vmem:[%s52 + $0xab0] sm:$0xff]
  %v472 = vld [vmem:[%s52 + $0xab8] sm:$0xff]
  %v473 = vld [vmem:[%s52 + $0xac0] sm:$0xff]
  %v474 = vld [vmem:[%s52 + $0xac8] sm:$0xff]
  %v475 = vld [vmem:[%s52 + $0xad0] sm:$0xff]
  %v476 = vld [vmem:[%s52 + $0xad8] sm:$0xff]
  %v477 = vld [vmem:[%s52 + $0xae0] sm:$0xff]
  %v478 = vld [vmem:[%s52 + $0xae8] sm:$0xff]
  %v479 = vld [vmem:[%s52 + $0xaf0] sm:$0xff]
  %v480 = vld [vmem:[%s52 + $0xaf8] sm:$0xff]
  %v481 = vld [vmem:[%s52 + $0xb00] sm:$0xff]
  %v482 = vld [vmem:[%s52 + $0xb08] sm:$0xff]
  %v483 = vld [vmem:[%s52 + $0xb10] sm:$0xff]
  %v484 = vld [vmem:[%s52 + $0xb18] sm:$0xff]
  %v485 = vld [vmem:[%s52 + $0xb20] sm:$0xff]
  %v486 = vld [vmem:[%s52 + $0xb28] sm:$0xff]
  %v487 = vld [vmem:[%s52 + $0xb30] sm:$0xff]
  %v488 = vld [vmem:[%s52 + $0xb38] sm:$0xff]
  %v489 = vld [vmem:[%s52 + $0xb40] sm:$0xff]
  %v490 = vld [vmem:[%s52 + $0xb48] sm:$0xff]
  %v491 = vld [vmem:[%s52 + $0xb50] sm:$0xff]
  %v492 = vld [vmem:[%s52 + $0xb58] sm:$0xff]
  %v493 = vld [vmem:[%s52 + $0xb60] sm:$0xff]
  %v494 = vld [vmem:[%s52 + $0xb68] sm:$0xff]
  %v495 = vld [vmem:[%s52 + $0xb70] sm:$0xff]
  %v496 = vld [vmem:[%s52 + $0xb78] sm:$0xff]
  %v497 = vld [vmem:[%s52 + $0xb80] sm:$0xff]
  %v498 = vld [vmem:[%s52 + $0xb88] sm:$0xff]
  %v499 = vld [vmem:[%s52 + $0xb90] sm:$0xff]
  %v500 = vld [vmem:[%s52 + $0xb98] sm:$0xff]
  %v501 = vld [vmem:[%s52 + $0xba0] sm:$0xff]
  %v502 = vld [vmem:[%s52 + $0xba8] sm:$0xff]
  %v503 = vld [vmem:[%s52 + $0xbb0] sm:$0xff]
  %v504 = vld [vmem:[%s52 + $0xbb8] sm:$0xff]
  %v505 = vld [vmem:[%s52 + $0xbc0] sm:$0xff]
  %v506 = vld [vmem:[%s52 + $0xbc8] sm:$0xff]
  %v507 = vld [vmem:[%s52 + $0xbd0] sm:$0xff]
  %v508 = vld [vmem:[%s52 + $0xbd8] sm:$0xff]
  %v509 = vld [vmem:[%s52 + $0xbe0] sm:$0xff]
  %v510 = vld [vmem:[%s52 + $0xbe8] sm:$0xff]
  %v511 = vld [vmem:[%s52 + $0xbf0] sm:$0xff]
  %v512 = vld [vmem:[%s52 + $0xbf8] sm:$0xff]
  %v513 = vld [vmem:[%s52 + $0xc00] sm:$0xff]
  %v514 = vld [vmem:[%s52 + $0xc08] sm:$0xff]
  %v515 = vld [vmem:[%s52 + $0xc10] sm:$0xff]
  %v516 = vld [vmem:[%s52 + $0xc18] sm:$0xff]
  %v517 = vld [vmem:[%s52 + $0xc20] sm:$0xff]
  %v518 = vld [vmem:[%s52 + $0xc28] sm:$0xff]
  %v519 = vld [vmem:[%s52 + $0xc30] sm:$0xff]
  %v520 = vld [vmem:[%s52 + $0xc38] sm:$0xff]
  %v521 = vld [vmem:[%s52 + $0xc40] sm:$0xff]
  %v522 = vld [vmem:[%s52 + $0xc48] sm:$0xff]
  %v523 = vld [vmem:[%s52 + $0xc50] sm:$0xff]
  %v524 = vld [vmem:[%s52 + $0xc58] sm:$0xff]
  %v525 = vld [vmem:[%s52 + $0xc60] sm:$0xff]
  %v526 = vld [vmem:[%s52 + $0xc68] sm:$0xff]
  %v527 = vld [vmem:[%s52 + $0xc70] sm:$0xff]
  %v528 = vld [vmem:[%s52 + $0xc78] sm:$0xff]
  %v529 = vld [vmem:[%s52 + $0xc80] sm:$0xff]
  %v530 = vld [vmem:[%s52 + $0xc88] sm:$0xff]
  %v531 = vld [vmem:[%s52 + $0xc90] sm:$0xff]
  %v532 = vld [vmem:[%s52 + $0xc98] sm:$0xff]
  %v533 = vld [vmem:[%s52 + $0xca0] sm:$0xff]
  %v534 = vld [vmem:[%s52 + $0xca8] sm:$0xff]
  %v535 = vld [vmem:[%s52 + $0xcb0] sm:$0xff]
  %v536 = vld [vmem:[%s52 + $0xcb8] sm:$0xff]
  %v537 = vld [vmem:[%s52 + $0xcc0] sm:$0xff]
  %v538 = vld [vmem:[%s52 + $0xcc8] sm:$0xff]
  %v539 = vld [vmem:[%s52 + $0xcd0] sm:$0xff]
  %v540 = vld [vmem:[%s52 + $0xcd8] sm:$0xff]
  %v541 = vld [vmem:[%s52 + $0xce0] sm:$0xff]
  %v542 = vld [vmem:[%s52 + $0xce8] sm:$0xff]
  %v543 = vld [vmem:[%s52 + $0xcf0] sm:$0xff]
  %v544 = vld [vmem:[%s52 + $0xcf8] sm:$0xff]
  %v545 = vld [vmem:[%s52 + $0xd00] sm:$0xff]
  %v546 = vld [vmem:[%s52 + $0xd08] sm:$0xff]
  %v547 = vld [vmem:[%s52 + $0xd10] sm:$0xff]
  %v548 = vld [vmem:[%s52 + $0xd18] sm:$0xff]
  %v549 = vld [vmem:[%s52 + $0xd20] sm:$0xff]
  %v550 = vld [vmem:[%s52 + $0xd28] sm:$0xff]
  %v551 = vld [vmem:[%s52 + $0xd30] sm:$0xff]
  %v552 = vld [vmem:[%s52 + $0xd38] sm:$0xff]
  %v553 = vld [vmem:[%s52 + $0xd40] sm:$0xff]
  %v554 = vld [vmem:[%s52 + $0xd48] sm:$0xff]
  %v555 = vld [vmem:[%s52 + $0xd50] sm:$0xff]
  %v556 = vld [vmem:[%s52 + $0xd58] sm:$0xff]
  %v557 = vld [vmem:[%s52 + $0xd60] sm:$0xff]
  %v558 = vld [vmem:[%s52 + $0xd68] sm:$0xff]
  %v559 = vld [vmem:[%s52 + $0xd70] sm:$0xff]
  %v560 = vld [vmem:[%s52 + $0xd78] sm:$0xff]
  %v561 = vld [vmem:[%s52 + $0xd80] sm:$0xff]
  %v562 = vld [vmem:[%s52 + $0xd88] sm:$0xff]
  %v563 = vld [vmem:[%s52 + $0xd90] sm:$0xff]
  %v564 = vld [vmem:[%s52 + $0xd98] sm:$0xff]
  %v565 = vld [vmem:[%s52 + $0xda0] sm:$0xff]
  %v566 = vld [vmem:[%s52 + $0xda8] sm:$0xff]
  %v567 = vld [vmem:[%s52 + $0xdb0] sm:$0xff]
  %v568 = vld [vmem:[%s52 + $0xdb8] sm:$0xff]
  %v569 = vld [vmem:[%s52 + $0xdc0] sm:$0xff]
  %v570 = vld [vmem:[%s52 + $0xdc8] sm:$0xff]
  %v571 = vld [vmem:[%s52 + $0xdd0] sm:$0xff]
  %v572 = vld [vmem:[%s52 + $0xdd8] sm:$0xff]
  %v573 = vld [vmem:[%s52 + $0xde0] sm:$0xff]
  %v574 = vld [vmem:[%s52 + $0xde8] sm:$0xff]
  %v575 = vld [vmem:[%s52 + $0xdf0] sm:$0xff]
  %v576 = vld [vmem:[%s52 + $0xdf8] sm:$0xff]
  %v577 = vld [vmem:[%s52 + $0xe00] sm:$0xff]
  %v578 = vld [vmem:[%s52 + $0xe08] sm:$0xff]
  %v579 = vld [vmem:[%s52 + $0xe10] sm:$0xff]
  %v580 = vld [vmem:[%s52 + $0xe18] sm:$0xff]
  %v581 = vld [vmem:[%s52 + $0xe20] sm:$0xff]
  %v582 = vld [vmem:[%s52 + $0xe28] sm:$0xff]
  %v583 = vld [vmem:[%s52 + $0xe30] sm:$0xff]
  %v584 = vld [vmem:[%s52 + $0xe38] sm:$0xff]
  %v585 = vld [vmem:[%s52 + $0xe40] sm:$0xff]
  %v586 = vld [vmem:[%s52 + $0xe48] sm:$0xff]
  %v587 = vld [vmem:[%s52 + $0xe50] sm:$0xff]
  %v588 = vld [vmem:[%s52 + $0xe58] sm:$0xff]
  %v589 = vld [vmem:[%s52 + $0xe60] sm:$0xff]
  %v590 = vld [vmem:[%s52 + $0xe68] sm:$0xff]
  %v591 = vld [vmem:[%s52 + $0xe70] sm:$0xff]
  %v592 = vld [vmem:[%s52 + $0xe78] sm:$0xff]
  %v593 = vld [vmem:[%s52 + $0xe80] sm:$0xff]
  %v594 = vld [vmem:[%s52 + $0xe88] sm:$0xff]
  %v595 = vld [vmem:[%s52 + $0xe90] sm:$0xff]
  %v596 = vld [vmem:[%s52 + $0xe98] sm:$0xff]
  %v597 = vld [vmem:[%s52 + $0xea0] sm:$0xff]
  %v598 = vld [vmem:[%s52 + $0xea8] sm:$0xff]
  %v599 = vld [vmem:[%s52 + $0xeb0] sm:$0xff]
  %v600 = vld [vmem:[%s52 + $0xeb8] sm:$0xff]
  %v601 = vld [vmem:[%s52 + $0xec0] sm:$0xff]
  %v602 = vld [vmem:[%s52 + $0xec8] sm:$0xff]
  %v603 = vld [vmem:[%s52 + $0xed0] sm:$0xff]
  %v604 = vld [vmem:[%s52 + $0xed8] sm:$0xff]
  %v605 = vld [vmem:[%s52 + $0xee0] sm:$0xff]
  %v606 = vld [vmem:[%s52 + $0xee8] sm:$0xff]
  %v607 = vld [vmem:[%s52 + $0xef0] sm:$0xff]
  %v608 = vld [vmem:[%s52 + $0xef8] sm:$0xff]
  %v609 = vld [vmem:[%s52 + $0xf00] sm:$0xff]
  %v610 = vld [vmem:[%s52 + $0xf08] sm:$0xff]
  %v611 = vld [vmem:[%s52 + $0xf10] sm:$0xff]
  %v612 = vld [vmem:[%s52 + $0xf18] sm:$0xff]
  %v613 = vld [vmem:[%s52 + $0xf20] sm:$0xff]
  %v614 = vld [vmem:[%s52 + $0xf28] sm:$0xff]
  %v615 = vld [vmem:[%s52 + $0xf30] sm:$0xff]
  %v616 = vld [vmem:[%s52 + $0xf38] sm:$0xff]
  %v617 = vld [vmem:[%s52 + $0xf40] sm:$0xff]
  %v618 = vld [vmem:[%s52 + $0xf48] sm:$0xff]
  %v619 = vld [vmem:[%s52 + $0xf50] sm:$0xff]
  %v620 = vld [vmem:[%s52 + $0xf58] sm:$0xff]
  %v621 = vld [vmem:[%s52 + $0xf60] sm:$0xff]
  %v622 = vld [vmem:[%s52 + $0xf68] sm:$0xff]
  %v623 = vld [vmem:[%s52 + $0xf70] sm:$0xff]
  %v624 = vld [vmem:[%s52 + $0xf78] sm:$0xff]
  %v625 = vld [vmem:[%s52 + $0xf80] sm:$0xff]
  %v626 = vld [vmem:[%s52 + $0xf88] sm:$0xff]
  %v627 = vld [vmem:[%s52 + $0xf90] sm:$0xff]
  %v628 = vld [vmem:[%s52 + $0xf98] sm:$0xff]
  %v629 = vld [vmem:[%s52 + $0xfa0] sm:$0xff]
  %v630 = vld [vmem:[%s52 + $0xfa8] sm:$0xff]
  %v631 = vld [vmem:[%s52 + $0xfb0] sm:$0xff]
  %v632 = vld [vmem:[%s52 + $0xfb8] sm:$0xff]
  %v633 = vld [vmem:[%s52 + $0xfc0] sm:$0xff]
  %v634 = vld [vmem:[%s52 + $0xfc8] sm:$0xff]
  %v635 = vld [vmem:[%s52 + $0xfd0] sm:$0xff]
  %v636 = vld [vmem:[%s52 + $0xfd8] sm:$0xff]
  %v637 = vld [vmem:[%s52 + $0xfe0] sm:$0xff]
  %v638 = vld [vmem:[%s52 + $0xfe8] sm:$0xff]
  %v639 = vld [vmem:[%s52 + $0xff0] sm:$0xff]
  %v640 = vld [vmem:[%s52 + $0xff8] sm:$0xff]
  %641 = vmatpush.msra.mxu0 %v144
  %642 = vmatpush.msra.mxu0 %v143
  %643 = vmatpush.msra.mxu0 %v142
  %644 = vmatpush.msra.mxu0 %v141
  %645 = vmatpush.msra.mxu0 %v140
  %646 = vmatpush.msra.mxu0 %v139
  %647 = vmatpush.msra.mxu0 %v138
  %648 = vmatpush.msra.mxu0 %v137
  %649 = vmatpush.msra.mxu0 %v136
  %650 = vmatpush.msra.mxu0 %v135
  %651 = vmatpush.msra.mxu0 %v134
  %652 = vmatpush.msra.mxu0 %v133
  %653 = vmatpush.msra.mxu0 %v132
  %654 = vmatpush.msra.mxu0 %v131
  %655 = vmatpush.msra.mxu0 %v130
  %656 = vmatpush.msra.mxu0 %v129
  %657 = vmatmul.f32.gmra.mxu0 %v65
  %v658 = vpop.f32.mrf.mxu0
  %v659 = vadd.f32 0.0, %v658
  %660 = vmatmul.f32.gmra.mxu0 %v97
  %v661 = vpop.f32.mrf.mxu0
  %v662 = vadd.f32 0.0, %v661
  %663 = vdwg.mxu0
  %664 = vmatpush.msra.mxu0 %v160
  %665 = vmatpush.msra.mxu0 %v159
  %666 = vmatpush.msra.mxu0 %v158
  %667 = vmatpush.msra.mxu0 %v157
  %668 = vmatpush.msra.mxu0 %v156
  %669 = vmatpush.msra.mxu0 %v155
  %670 = vmatpush.msra.mxu0 %v154
  %671 = vmatpush.msra.mxu0 %v153
  %672 = vmatpush.msra.mxu0 %v152
  %673 = vmatpush.msra.mxu0 %v151
  %674 = vmatpush.msra.mxu0 %v150
  %675 = vmatpush.msra.mxu0 %v149
  %676 = vmatpush.msra.mxu0 %v148
  %677 = vmatpush.msra.mxu0 %v147
  %678 = vmatpush.msra.mxu0 %v146
  %679 = vmatpush.msra.mxu0 %v145
  %680 = vmatmul.f32.gmra.mxu0 %v66
  %v681 = vpop.f32.mrf.mxu0
  %v682 = vadd.f32 %v659, %v681
  %683 = vmatmul.f32.gmra.mxu0 %v98
  %v684 = vpop.f32.mrf.mxu0
  %v685 = vadd.f32 %v662, %v684
  %686 = vdwg.mxu0
  %687 = vmatpush.msra.mxu0 %v176
  %688 = vmatpush.msra.mxu0 %v175
  %689 = vmatpush.msra.mxu0 %v174
  %690 = vmatpush.msra.mxu0 %v173
  %691 = vmatpush.msra.mxu0 %v172
  %692 = vmatpush.msra.mxu0 %v171
  %693 = vmatpush.msra.mxu0 %v170
  %694 = vmatpush.msra.mxu0 %v169
  %695 = vmatpush.msra.mxu0 %v168
  %696 = vmatpush.msra.mxu0 %v167
  %697 = vmatpush.msra.mxu0 %v166
  %698 = vmatpush.msra.mxu0 %v165
  %699 = vmatpush.msra.mxu0 %v164
  %700 = vmatpush.msra.mxu0 %v163
  %701 = vmatpush.msra.mxu0 %v162
  %702 = vmatpush.msra.mxu0 %v161
  %703 = vmatmul.f32.gmra.mxu0 %v67
  %v704 = vpop.f32.mrf.mxu0
  %v705 = vadd.f32 %v682, %v704
  %706 = vmatmul.f32.gmra.mxu0 %v99
  %v707 = vpop.f32.mrf.mxu0
  %v708 = vadd.f32 %v685, %v707
  %709 = vdwg.mxu0
  %710 = vmatpush.msra.mxu0 %v192
  %711 = vmatpush.msra.mxu0 %v191
  %712 = vmatpush.msra.mxu0 %v190
  %713 = vmatpush.msra.mxu0 %v189
  %714 = vmatpush.msra.mxu0 %v188
  %715 = vmatpush.msra.mxu0 %v187
  %716 = vmatpush.msra.mxu0 %v186
  %717 = vmatpush.msra.mxu0 %v185
  %718 = vmatpush.msra.mxu0 %v184
  %719 = vmatpush.msra.mxu0 %v183
  %720 = vmatpush.msra.mxu0 %v182
  %721 = vmatpush.msra.mxu0 %v181
  %722 = vmatpush.msra.mxu0 %v180
  %723 = vmatpush.msra.mxu0 %v179
  %724 = vmatpush.msra.mxu0 %v178
  %725 = vmatpush.msra.mxu0 %v177
  %726 = vmatmul.f32.gmra.mxu0 %v68
  %v727 = vpop.f32.mrf.mxu0
  %v728 = vadd.f32 %v705, %v727
  %729 = vmatmul.f32.gmra.mxu0 %v100
  %v730 = vpop.f32.mrf.mxu0
  %v731 = vadd.f32 %v708, %v730
  %732 = vdwg.mxu0
  %733 = vmatpush.msra.mxu0 %v208
  %734 = vmatpush.msra.mxu0 %v207
  %735 = vmatpush.msra.mxu0 %v206
  %736 = vmatpush.msra.mxu0 %v205
  %737 = vmatpush.msra.mxu0 %v204
  %738 = vmatpush.msra.mxu0 %v203
  %739 = vmatpush.msra.mxu0 %v202
  %740 = vmatpush.msra.mxu0 %v201
  %741 = vmatpush.msra.mxu0 %v200
  %742 = vmatpush.msra.mxu0 %v199
  %743 = vmatpush.msra.mxu0 %v198
  %744 = vmatpush.msra.mxu0 %v197
  %745 = vmatpush.msra.mxu0 %v196
  %746 = vmatpush.msra.mxu0 %v195
  %747 = vmatpush.msra.mxu0 %v194
  %748 = vmatpush.msra.mxu0 %v193
  %749 = vmatmul.f32.gmra.mxu0 %v69
  %v750 = vpop.f32.mrf.mxu0
  %v751 = vadd.f32 %v728, %v750
  %752 = vmatmul.f32.gmra.mxu0 %v101
  %v753 = vpop.f32.mrf.mxu0
  %v754 = vadd.f32 %v731, %v753
  %755 = vdwg.mxu0
  %756 = vmatpush.msra.mxu0 %v224
  %757 = vmatpush.msra.mxu0 %v223
  %758 = vmatpush.msra.mxu0 %v222
  %759 = vmatpush.msra.mxu0 %v221
  %760 = vmatpush.msra.mxu0 %v220
  %761 = vmatpush.msra.mxu0 %v219
  %762 = vmatpush.msra.mxu0 %v218
  %763 = vmatpush.msra.mxu0 %v217
  %764 = vmatpush.msra.mxu0 %v216
  %765 = vmatpush.msra.mxu0 %v215
  %766 = vmatpush.msra.mxu0 %v214
  %767 = vmatpush.msra.mxu0 %v213
  %768 = vmatpush.msra.mxu0 %v212
  %769 = vmatpush.msra.mxu0 %v211
  %770 = vmatpush.msra.mxu0 %v210
  %771 = vmatpush.msra.mxu0 %v209
  %772 = vmatmul.f32.gmra.mxu0 %v70
  %v773 = vpop.f32.mrf.mxu0
  %v774 = vadd.f32 %v751, %v773
  %775 = vmatmul.f32.gmra.mxu0 %v102
  %v776 = vpop.f32.mrf.mxu0
  %v777 = vadd.f32 %v754, %v776
  %778 = vdwg.mxu0
  %779 = vmatpush.msra.mxu0 %v240
  %780 = vmatpush.msra.mxu0 %v239
  %781 = vmatpush.msra.mxu0 %v238
  %782 = vmatpush.msra.mxu0 %v237
  %783 = vmatpush.msra.mxu0 %v236
  %784 = vmatpush.msra.mxu0 %v235
  %785 = vmatpush.msra.mxu0 %v234
  %786 = vmatpush.msra.mxu0 %v233
  %787 = vmatpush.msra.mxu0 %v232
  %788 = vmatpush.msra.mxu0 %v231
  %789 = vmatpush.msra.mxu0 %v230
  %790 = vmatpush.msra.mxu0 %v229
  %791 = vmatpush.msra.mxu0 %v228
  %792 = vmatpush.msra.mxu0 %v227
  %793 = vmatpush.msra.mxu0 %v226
  %794 = vmatpush.msra.mxu0 %v225
  %795 = vmatmul.f32.gmra.mxu0 %v71
  %v796 = vpop.f32.mrf.mxu0
  %v797 = vadd.f32 %v774, %v796
  %798 = vmatmul.f32.gmra.mxu0 %v103
  %v799 = vpop.f32.mrf.mxu0
  %v800 = vadd.f32 %v777, %v799
  %801 = vdwg.mxu0
  %802 = vmatpush.msra.mxu0 %v256
  %803 = vmatpush.msra.mxu0 %v255
  %804 = vmatpush.msra.mxu0 %v254
  %805 = vmatpush.msra.mxu0 %v253
  %806 = vmatpush.msra.mxu0 %v252
  %807 = vmatpush.msra.mxu0 %v251
  %808 = vmatpush.msra.mxu0 %v250
  %809 = vmatpush.msra.mxu0 %v249
  %810 = vmatpush.msra.mxu0 %v248
  %811 = vmatpush.msra.mxu0 %v247
  %812 = vmatpush.msra.mxu0 %v246
  %813 = vmatpush.msra.mxu0 %v245
  %814 = vmatpush.msra.mxu0 %v244
  %815 = vmatpush.msra.mxu0 %v243
  %816 = vmatpush.msra.mxu0 %v242
  %817 = vmatpush.msra.mxu0 %v241
  %818 = vmatmul.f32.gmra.mxu0 %v72
  %v819 = vpop.f32.mrf.mxu0
  %v820 = vadd.f32 %v797, %v819
  %821 = vmatmul.f32.gmra.mxu0 %v104
  %v822 = vpop.f32.mrf.mxu0
  %v823 = vadd.f32 %v800, %v822
  %824 = vdwg.mxu0
  %825 = vmatpush.msra.mxu0 %v272
  %826 = vmatpush.msra.mxu0 %v271
  %827 = vmatpush.msra.mxu0 %v270
  %828 = vmatpush.msra.mxu0 %v269
  %829 = vmatpush.msra.mxu0 %v268
  %830 = vmatpush.msra.mxu0 %v267
  %831 = vmatpush.msra.mxu0 %v266
  %832 = vmatpush.msra.mxu0 %v265
  %833 = vmatpush.msra.mxu0 %v264
  %834 = vmatpush.msra.mxu0 %v263
  %835 = vmatpush.msra.mxu0 %v262
  %836 = vmatpush.msra.mxu0 %v261
  %837 = vmatpush.msra.mxu0 %v260
  %838 = vmatpush.msra.mxu0 %v259
  %839 = vmatpush.msra.mxu0 %v258
  %840 = vmatpush.msra.mxu0 %v257
  %841 = vmatmul.f32.gmra.mxu0 %v73
  %v842 = vpop.f32.mrf.mxu0
  %v843 = vadd.f32 %v820, %v842
  %844 = vmatmul.f32.gmra.mxu0 %v105
  %v845 = vpop.f32.mrf.mxu0
  %v846 = vadd.f32 %v823, %v845
  %847 = vdwg.mxu0
  %848 = vmatpush.msra.mxu0 %v288
  %849 = vmatpush.msra.mxu0 %v287
  %850 = vmatpush.msra.mxu0 %v286
  %851 = vmatpush.msra.mxu0 %v285
  %852 = vmatpush.msra.mxu0 %v284
  %853 = vmatpush.msra.mxu0 %v283
  %854 = vmatpush.msra.mxu0 %v282
  %855 = vmatpush.msra.mxu0 %v281
  %856 = vmatpush.msra.mxu0 %v280
  %857 = vmatpush.msra.mxu0 %v279
  %858 = vmatpush.msra.mxu0 %v278
  %859 = vmatpush.msra.mxu0 %v277
  %860 = vmatpush.msra.mxu0 %v276
  %861 = vmatpush.msra.mxu0 %v275
  %862 = vmatpush.msra.mxu0 %v274
  %863 = vmatpush.msra.mxu0 %v273
  %864 = vmatmul.f32.gmra.mxu0 %v74
  %v865 = vpop.f32.mrf.mxu0
  %v866 = vadd.f32 %v843, %v865
  %867 = vmatmul.f32.gmra.mxu0 %v106
  %v868 = vpop.f32.mrf.mxu0
  %v869 = vadd.f32 %v846, %v868
  %870 = vdwg.mxu0
  %871 = vmatpush.msra.mxu0 %v304
  %872 = vmatpush.msra.mxu0 %v303
  %873 = vmatpush.msra.mxu0 %v302
  %874 = vmatpush.msra.mxu0 %v301
  %875 = vmatpush.msra.mxu0 %v300
  %876 = vmatpush.msra.mxu0 %v299
  %877 = vmatpush.msra.mxu0 %v298
  %878 = vmatpush.msra.mxu0 %v297
  %879 = vmatpush.msra.mxu0 %v296
  %880 = vmatpush.msra.mxu0 %v295
  %881 = vmatpush.msra.mxu0 %v294
  %882 = vmatpush.msra.mxu0 %v293
  %883 = vmatpush.msra.mxu0 %v292
  %884 = vmatpush.msra.mxu0 %v291
  %885 = vmatpush.msra.mxu0 %v290
  %886 = vmatpush.msra.mxu0 %v289
  %887 = vmatmul.f32.gmra.mxu0 %v75
  %v888 = vpop.f32.mrf.mxu0
  %v889 = vadd.f32 %v866, %v888
  %890 = vmatmul.f32.gmra.mxu0 %v107
  %v891 = vpop.f32.mrf.mxu0
  %v892 = vadd.f32 %v869, %v891
  %893 = vdwg.mxu0
  %894 = vmatpush.msra.mxu0 %v320
  %895 = vmatpush.msra.mxu0 %v319
  %896 = vmatpush.msra.mxu0 %v318
  %897 = vmatpush.msra.mxu0 %v317
  %898 = vmatpush.msra.mxu0 %v316
  %899 = vmatpush.msra.mxu0 %v315
  %900 = vmatpush.msra.mxu0 %v314
  %901 = vmatpush.msra.mxu0 %v313
  %902 = vmatpush.msra.mxu0 %v312
  %903 = vmatpush.msra.mxu0 %v311
  %904 = vmatpush.msra.mxu0 %v310
  %905 = vmatpush.msra.mxu0 %v309
  %906 = vmatpush.msra.mxu0 %v308
  %907 = vmatpush.msra.mxu0 %v307
  %908 = vmatpush.msra.mxu0 %v306
  %909 = vmatpush.msra.mxu0 %v305
  %910 = vmatmul.f32.gmra.mxu0 %v76
  %v911 = vpop.f32.mrf.mxu0
  %v912 = vadd.f32 %v889, %v911
  %913 = vmatmul.f32.gmra.mxu0 %v108
  %v914 = vpop.f32.mrf.mxu0
  %v915 = vadd.f32 %v892, %v914
  %916 = vdwg.mxu0
  %917 = vmatpush.msra.mxu0 %v336
  %918 = vmatpush.msra.mxu0 %v335
  %919 = vmatpush.msra.mxu0 %v334
  %920 = vmatpush.msra.mxu0 %v333
  %921 = vmatpush.msra.mxu0 %v332
  %922 = vmatpush.msra.mxu0 %v331
  %923 = vmatpush.msra.mxu0 %v330
  %924 = vmatpush.msra.mxu0 %v329
  %925 = vmatpush.msra.mxu0 %v328
  %926 = vmatpush.msra.mxu0 %v327
  %927 = vmatpush.msra.mxu0 %v326
  %928 = vmatpush.msra.mxu0 %v325
  %929 = vmatpush.msra.mxu0 %v324
  %930 = vmatpush.msra.mxu0 %v323
  %931 = vmatpush.msra.mxu0 %v322
  %932 = vmatpush.msra.mxu0 %v321
  %933 = vmatmul.f32.gmra.mxu0 %v77
  %v934 = vpop.f32.mrf.mxu0
  %v935 = vadd.f32 %v912, %v934
  %936 = vmatmul.f32.gmra.mxu0 %v109
  %v937 = vpop.f32.mrf.mxu0
  %v938 = vadd.f32 %v915, %v937
  %939 = vdwg.mxu0
  %940 = vmatpush.msra.mxu0 %v352
  %941 = vmatpush.msra.mxu0 %v351
  %942 = vmatpush.msra.mxu0 %v350
  %943 = vmatpush.msra.mxu0 %v349
  %944 = vmatpush.msra.mxu0 %v348
  %945 = vmatpush.msra.mxu0 %v347
  %946 = vmatpush.msra.mxu0 %v346
  %947 = vmatpush.msra.mxu0 %v345
  %948 = vmatpush.msra.mxu0 %v344
  %949 = vmatpush.msra.mxu0 %v343
  %950 = vmatpush.msra.mxu0 %v342
  %951 = vmatpush.msra.mxu0 %v341
  %952 = vmatpush.msra.mxu0 %v340
  %953 = vmatpush.msra.mxu0 %v339
  %954 = vmatpush.msra.mxu0 %v338
  %955 = vmatpush.msra.mxu0 %v337
  %956 = vmatmul.f32.gmra.mxu0 %v78
  %v957 = vpop.f32.mrf.mxu0
  %v958 = vadd.f32 %v935, %v957
  %959 = vmatmul.f32.gmra.mxu0 %v110
  %v960 = vpop.f32.mrf.mxu0
  %v961 = vadd.f32 %v938, %v960
  %962 = vdwg.mxu0
  %963 = vmatpush.msra.mxu0 %v368
  %964 = vmatpush.msra.mxu0 %v367
  %965 = vmatpush.msra.mxu0 %v366
  %966 = vmatpush.msra.mxu0 %v365
  %967 = vmatpush.msra.mxu0 %v364
  %968 = vmatpush.msra.mxu0 %v363
  %969 = vmatpush.msra.mxu0 %v362
  %970 = vmatpush.msra.mxu0 %v361
  %971 = vmatpush.msra.mxu0 %v360
  %972 = vmatpush.msra.mxu0 %v359
  %973 = vmatpush.msra.mxu0 %v358
  %974 = vmatpush.msra.mxu0 %v357
  %975 = vmatpush.msra.mxu0 %v356
  %976 = vmatpush.msra.mxu0 %v355
  %977 = vmatpush.msra.mxu0 %v354
  %978 = vmatpush.msra.mxu0 %v353
  %979 = vmatmul.f32.gmra.mxu0 %v79
  %v980 = vpop.f32.mrf.mxu0
  %v981 = vadd.f32 %v958, %v980
  %982 = vmatmul.f32.gmra.mxu0 %v111
  %v983 = vpop.f32.mrf.mxu0
  %v984 = vadd.f32 %v961, %v983
  %985 = vdwg.mxu0
  %986 = vmatpush.msra.mxu0 %v384
  %987 = vmatpush.msra.mxu0 %v383
  %988 = vmatpush.msra.mxu0 %v382
  %989 = vmatpush.msra.mxu0 %v381
  %990 = vmatpush.msra.mxu0 %v380
  %991 = vmatpush.msra.mxu0 %v379
  %992 = vmatpush.msra.mxu0 %v378
  %993 = vmatpush.msra.mxu0 %v377
  %994 = vmatpush.msra.mxu0 %v376
  %995 = vmatpush.msra.mxu0 %v375
  %996 = vmatpush.msra.mxu0 %v374
  %997 = vmatpush.msra.mxu0 %v373
  %998 = vmatpush.msra.mxu0 %v372
  %999 = vmatpush.msra.mxu0 %v371
  %1000 = vmatpush.msra.mxu0 %v370
  %1001 = vmatpush.msra.mxu0 %v369
  %1002 = vmatmul.f32.gmra.mxu0 %v80
  %v1003 = vpop.f32.mrf.mxu0
  %v1004 = vadd.f32 %v981, %v1003
  %1005 = vmatmul.f32.gmra.mxu0 %v112
  %v1006 = vpop.f32.mrf.mxu0
  %v1007 = vadd.f32 %v984, %v1006
  %1008 = vdwg.mxu0
  %1009 = vmatpush.msra.mxu0 %v400
  %1010 = vmatpush.msra.mxu0 %v399
  %1011 = vmatpush.msra.mxu0 %v398
  %1012 = vmatpush.msra.mxu0 %v397
  %1013 = vmatpush.msra.mxu0 %v396
  %1014 = vmatpush.msra.mxu0 %v395
  %1015 = vmatpush.msra.mxu0 %v394
  %1016 = vmatpush.msra.mxu0 %v393
  %1017 = vmatpush.msra.mxu0 %v392
  %1018 = vmatpush.msra.mxu0 %v391
  %1019 = vmatpush.msra.mxu0 %v390
  %1020 = vmatpush.msra.mxu0 %v389
  %1021 = vmatpush.msra.mxu0 %v388
  %1022 = vmatpush.msra.mxu0 %v387
  %1023 = vmatpush.msra.mxu0 %v386
  %1024 = vmatpush.msra.mxu0 %v385
  %1025 = vmatmul.f32.gmra.mxu0 %v81
  %v1026 = vpop.f32.mrf.mxu0
  %v1027 = vadd.f32 %v1004, %v1026
  %1028 = vmatmul.f32.gmra.mxu0 %v113
  %v1029 = vpop.f32.mrf.mxu0
  %v1030 = vadd.f32 %v1007, %v1029
  %1031 = vdwg.mxu0
  %1032 = vmatpush.msra.mxu0 %v416
  %1033 = vmatpush.msra.mxu0 %v415
  %1034 = vmatpush.msra.mxu0 %v414
  %1035 = vmatpush.msra.mxu0 %v413
  %1036 = vmatpush.msra.mxu0 %v412
  %1037 = vmatpush.msra.mxu0 %v411
  %1038 = vmatpush.msra.mxu0 %v410
  %1039 = vmatpush.msra.mxu0 %v409
  %1040 = vmatpush.msra.mxu0 %v408
  %1041 = vmatpush.msra.mxu0 %v407
  %1042 = vmatpush.msra.mxu0 %v406
  %1043 = vmatpush.msra.mxu0 %v405
  %1044 = vmatpush.msra.mxu0 %v404
  %1045 = vmatpush.msra.mxu0 %v403
  %1046 = vmatpush.msra.mxu0 %v402
  %1047 = vmatpush.msra.mxu0 %v401
  %1048 = vmatmul.f32.gmra.mxu0 %v82
  %v1049 = vpop.f32.mrf.mxu0
  %v1050 = vadd.f32 %v1027, %v1049
  %1051 = vmatmul.f32.gmra.mxu0 %v114
  %v1052 = vpop.f32.mrf.mxu0
  %v1053 = vadd.f32 %v1030, %v1052
  %1054 = vdwg.mxu0
  %1055 = vmatpush.msra.mxu0 %v432
  %1056 = vmatpush.msra.mxu0 %v431
  %1057 = vmatpush.msra.mxu0 %v430
  %1058 = vmatpush.msra.mxu0 %v429
  %1059 = vmatpush.msra.mxu0 %v428
  %1060 = vmatpush.msra.mxu0 %v427
  %1061 = vmatpush.msra.mxu0 %v426
  %1062 = vmatpush.msra.mxu0 %v425
  %1063 = vmatpush.msra.mxu0 %v424
  %1064 = vmatpush.msra.mxu0 %v423
  %1065 = vmatpush.msra.mxu0 %v422
  %1066 = vmatpush.msra.mxu0 %v421
  %1067 = vmatpush.msra.mxu0 %v420
  %1068 = vmatpush.msra.mxu0 %v419
  %1069 = vmatpush.msra.mxu0 %v418
  %1070 = vmatpush.msra.mxu0 %v417
  %1071 = vmatmul.f32.gmra.mxu0 %v83
  %v1072 = vpop.f32.mrf.mxu0
  %v1073 = vadd.f32 %v1050, %v1072
  %1074 = vmatmul.f32.gmra.mxu0 %v115
  %v1075 = vpop.f32.mrf.mxu0
  %v1076 = vadd.f32 %v1053, %v1075
  %1077 = vdwg.mxu0
  %1078 = vmatpush.msra.mxu0 %v448
  %1079 = vmatpush.msra.mxu0 %v447
  %1080 = vmatpush.msra.mxu0 %v446
  %1081 = vmatpush.msra.mxu0 %v445
  %1082 = vmatpush.msra.mxu0 %v444
  %1083 = vmatpush.msra.mxu0 %v443
  %1084 = vmatpush.msra.mxu0 %v442
  %1085 = vmatpush.msra.mxu0 %v441
  %1086 = vmatpush.msra.mxu0 %v440
  %1087 = vmatpush.msra.mxu0 %v439
  %1088 = vmatpush.msra.mxu0 %v438
  %1089 = vmatpush.msra.mxu0 %v437
  %1090 = vmatpush.msra.mxu0 %v436
  %1091 = vmatpush.msra.mxu0 %v435
  %1092 = vmatpush.msra.mxu0 %v434
  %1093 = vmatpush.msra.mxu0 %v433
  %1094 = vmatmul.f32.gmra.mxu0 %v84
  %v1095 = vpop.f32.mrf.mxu0
  %v1096 = vadd.f32 %v1073, %v1095
  %1097 = vmatmul.f32.gmra.mxu0 %v116
  %v1098 = vpop.f32.mrf.mxu0
  %v1099 = vadd.f32 %v1076, %v1098
  %1100 = vdwg.mxu0
  %1101 = vmatpush.msra.mxu0 %v464
  %1102 = vmatpush.msra.mxu0 %v463
  %1103 = vmatpush.msra.mxu0 %v462
  %1104 = vmatpush.msra.mxu0 %v461
  %1105 = vmatpush.msra.mxu0 %v460
  %1106 = vmatpush.msra.mxu0 %v459
  %1107 = vmatpush.msra.mxu0 %v458
  %1108 = vmatpush.msra.mxu0 %v457
  %1109 = vmatpush.msra.mxu0 %v456
  %1110 = vmatpush.msra.mxu0 %v455
  %1111 = vmatpush.msra.mxu0 %v454
  %1112 = vmatpush.msra.mxu0 %v453
  %1113 = vmatpush.msra.mxu0 %v452
  %1114 = vmatpush.msra.mxu0 %v451
  %1115 = vmatpush.msra.mxu0 %v450
  %1116 = vmatpush.msra.mxu0 %v449
  %1117 = vmatmul.f32.gmra.mxu0 %v85
  %v1118 = vpop.f32.mrf.mxu0
  %v1119 = vadd.f32 %v1096, %v1118
  %1120 = vmatmul.f32.gmra.mxu0 %v117
  %v1121 = vpop.f32.mrf.mxu0
  %v1122 = vadd.f32 %v1099, %v1121
  %1123 = vdwg.mxu0
  %1124 = vmatpush.msra.mxu0 %v480
  %1125 = vmatpush.msra.mxu0 %v479
  %1126 = vmatpush.msra.mxu0 %v478
  %1127 = vmatpush.msra.mxu0 %v477
  %1128 = vmatpush.msra.mxu0 %v476
  %1129 = vmatpush.msra.mxu0 %v475
  %1130 = vmatpush.msra.mxu0 %v474
  %1131 = vmatpush.msra.mxu0 %v473
  %1132 = vmatpush.msra.mxu0 %v472
  %1133 = vmatpush.msra.mxu0 %v471
  %1134 = vmatpush.msra.mxu0 %v470
  %1135 = vmatpush.msra.mxu0 %v469
  %1136 = vmatpush.msra.mxu0 %v468
  %1137 = vmatpush.msra.mxu0 %v467
  %1138 = vmatpush.msra.mxu0 %v466
  %1139 = vmatpush.msra.mxu0 %v465
  %1140 = vmatmul.f32.gmra.mxu0 %v86
  %v1141 = vpop.f32.mrf.mxu0
  %v1142 = vadd.f32 %v1119, %v1141
  %1143 = vmatmul.f32.gmra.mxu0 %v118
  %v1144 = vpop.f32.mrf.mxu0
  %v1145 = vadd.f32 %v1122, %v1144
  %1146 = vdwg.mxu0
  %1147 = vmatpush.msra.mxu0 %v496
  %1148 = vmatpush.msra.mxu0 %v495
  %1149 = vmatpush.msra.mxu0 %v494
  %1150 = vmatpush.msra.mxu0 %v493
  %1151 = vmatpush.msra.mxu0 %v492
  %1152 = vmatpush.msra.mxu0 %v491
  %1153 = vmatpush.msra.mxu0 %v490
  %1154 = vmatpush.msra.mxu0 %v489
  %1155 = vmatpush.msra.mxu0 %v488
  %1156 = vmatpush.msra.mxu0 %v487
  %1157 = vmatpush.msra.mxu0 %v486
  %1158 = vmatpush.msra.mxu0 %v485
  %1159 = vmatpush.msra.mxu0 %v484
  %1160 = vmatpush.msra.mxu0 %v483
  %1161 = vmatpush.msra.mxu0 %v482
  %1162 = vmatpush.msra.mxu0 %v481
  %1163 = vmatmul.f32.gmra.mxu0 %v87
  %v1164 = vpop.f32.mrf.mxu0
  %v1165 = vadd.f32 %v1142, %v1164
  %1166 = vmatmul.f32.gmra.mxu0 %v119
  %v1167 = vpop.f32.mrf.mxu0
  %v1168 = vadd.f32 %v1145, %v1167
  %1169 = vdwg.mxu0
  %1170 = vmatpush.msra.mxu0 %v512
  %1171 = vmatpush.msra.mxu0 %v511
  %1172 = vmatpush.msra.mxu0 %v510
  %1173 = vmatpush.msra.mxu0 %v509
  %1174 = vmatpush.msra.mxu0 %v508
  %1175 = vmatpush.msra.mxu0 %v507
  %1176 = vmatpush.msra.mxu0 %v506
  %1177 = vmatpush.msra.mxu0 %v505
  %1178 = vmatpush.msra.mxu0 %v504
  %1179 = vmatpush.msra.mxu0 %v503
  %1180 = vmatpush.msra.mxu0 %v502
  %1181 = vmatpush.msra.mxu0 %v501
  %1182 = vmatpush.msra.mxu0 %v500
  %1183 = vmatpush.msra.mxu0 %v499
  %1184 = vmatpush.msra.mxu0 %v498
  %1185 = vmatpush.msra.mxu0 %v497
  %1186 = vmatmul.f32.gmra.mxu0 %v88
  %v1187 = vpop.f32.mrf.mxu0
  %v1188 = vadd.f32 %v1165, %v1187
  %1189 = vmatmul.f32.gmra.mxu0 %v120
  %v1190 = vpop.f32.mrf.mxu0
  %v1191 = vadd.f32 %v1168, %v1190
  %1192 = vdwg.mxu0
  %1193 = vmatpush.msra.mxu0 %v528
  %1194 = vmatpush.msra.mxu0 %v527
  %1195 = vmatpush.msra.mxu0 %v526
  %1196 = vmatpush.msra.mxu0 %v525
  %1197 = vmatpush.msra.mxu0 %v524
  %1198 = vmatpush.msra.mxu0 %v523
  %1199 = vmatpush.msra.mxu0 %v522
  %1200 = vmatpush.msra.mxu0 %v521
  %1201 = vmatpush.msra.mxu0 %v520
  %1202 = vmatpush.msra.mxu0 %v519
  %1203 = vmatpush.msra.mxu0 %v518
  %1204 = vmatpush.msra.mxu0 %v517
  %1205 = vmatpush.msra.mxu0 %v516
  %1206 = vmatpush.msra.mxu0 %v515
  %1207 = vmatpush.msra.mxu0 %v514
  %1208 = vmatpush.msra.mxu0 %v513
  %1209 = vmatmul.f32.gmra.mxu0 %v89
  %v1210 = vpop.f32.mrf.mxu0
  %v1211 = vadd.f32 %v1188, %v1210
  %1212 = vmatmul.f32.gmra.mxu0 %v121
  %v1213 = vpop.f32.mrf.mxu0
  %v1214 = vadd.f32 %v1191, %v1213
  %1215 = vdwg.mxu0
  %1216 = vmatpush.msra.mxu0 %v544
  %1217 = vmatpush.msra.mxu0 %v543
  %1218 = vmatpush.msra.mxu0 %v542
  %1219 = vmatpush.msra.mxu0 %v541
  %1220 = vmatpush.msra.mxu0 %v540
  %1221 = vmatpush.msra.mxu0 %v539
  %1222 = vmatpush.msra.mxu0 %v538
  %1223 = vmatpush.msra.mxu0 %v537
  %1224 = vmatpush.msra.mxu0 %v536
  %1225 = vmatpush.msra.mxu0 %v535
  %1226 = vmatpush.msra.mxu0 %v534
  %1227 = vmatpush.msra.mxu0 %v533
  %1228 = vmatpush.msra.mxu0 %v532
  %1229 = vmatpush.msra.mxu0 %v531
  %1230 = vmatpush.msra.mxu0 %v530
  %1231 = vmatpush.msra.mxu0 %v529
  %1232 = vmatmul.f32.gmra.mxu0 %v90
  %v1233 = vpop.f32.mrf.mxu0
  %v1234 = vadd.f32 %v1211, %v1233
  %1235 = vmatmul.f32.gmra.mxu0 %v122
  %v1236 = vpop.f32.mrf.mxu0
  %v1237 = vadd.f32 %v1214, %v1236
  %1238 = vdwg.mxu0
  %1239 = vmatpush.msra.mxu0 %v560
  %1240 = vmatpush.msra.mxu0 %v559
  %1241 = vmatpush.msra.mxu0 %v558
  %1242 = vmatpush.msra.mxu0 %v557
  %1243 = vmatpush.msra.mxu0 %v556
  %1244 = vmatpush.msra.mxu0 %v555
  %1245 = vmatpush.msra.mxu0 %v554
  %1246 = vmatpush.msra.mxu0 %v553
  %1247 = vmatpush.msra.mxu0 %v552
  %1248 = vmatpush.msra.mxu0 %v551
  %1249 = vmatpush.msra.mxu0 %v550
  %1250 = vmatpush.msra.mxu0 %v549
  %1251 = vmatpush.msra.mxu0 %v548
  %1252 = vmatpush.msra.mxu0 %v547
  %1253 = vmatpush.msra.mxu0 %v546
  %1254 = vmatpush.msra.mxu0 %v545
  %1255 = vmatmul.f32.gmra.mxu0 %v91
  %v1256 = vpop.f32.mrf.mxu0
  %v1257 = vadd.f32 %v1234, %v1256
  %1258 = vmatmul.f32.gmra.mxu0 %v123
  %v1259 = vpop.f32.mrf.mxu0
  %v1260 = vadd.f32 %v1237, %v1259
  %1261 = vdwg.mxu0
  %1262 = vmatpush.msra.mxu0 %v576
  %1263 = vmatpush.msra.mxu0 %v575
  %1264 = vmatpush.msra.mxu0 %v574
  %1265 = vmatpush.msra.mxu0 %v573
  %1266 = vmatpush.msra.mxu0 %v572
  %1267 = vmatpush.msra.mxu0 %v571
  %1268 = vmatpush.msra.mxu0 %v570
  %1269 = vmatpush.msra.mxu0 %v569
  %1270 = vmatpush.msra.mxu0 %v568
  %1271 = vmatpush.msra.mxu0 %v567
  %1272 = vmatpush.msra.mxu0 %v566
  %1273 = vmatpush.msra.mxu0 %v565
  %1274 = vmatpush.msra.mxu0 %v564
  %1275 = vmatpush.msra.mxu0 %v563
  %1276 = vmatpush.msra.mxu0 %v562
  %1277 = vmatpush.msra.mxu0 %v561
  %1278 = vmatmul.f32.gmra.mxu0 %v92
  %v1279 = vpop.f32.mrf.mxu0
  %v1280 = vadd.f32 %v1257, %v1279
  %1281 = vmatmul.f32.gmra.mxu0 %v124
  %v1282 = vpop.f32.mrf.mxu0
  %v1283 = vadd.f32 %v1260, %v1282
  %1284 = vdwg.mxu0
  %1285 = vmatpush.msra.mxu0 %v592
  %1286 = vmatpush.msra.mxu0 %v591
  %1287 = vmatpush.msra.mxu0 %v590
  %1288 = vmatpush.msra.mxu0 %v589
  %1289 = vmatpush.msra.mxu0 %v588
  %1290 = vmatpush.msra.mxu0 %v587
  %1291 = vmatpush.msra.mxu0 %v586
  %1292 = vmatpush.msra.mxu0 %v585
  %1293 = vmatpush.msra.mxu0 %v584
  %1294 = vmatpush.msra.mxu0 %v583
  %1295 = vmatpush.msra.mxu0 %v582
  %1296 = vmatpush.msra.mxu0 %v581
  %1297 = vmatpush.msra.mxu0 %v580
  %1298 = vmatpush.msra.mxu0 %v579
  %1299 = vmatpush.msra.mxu0 %v578
  %1300 = vmatpush.msra.mxu0 %v577
  %1301 = vmatmul.f32.gmra.mxu0 %v93
  %v1302 = vpop.f32.mrf.mxu0
  %v1303 = vadd.f32 %v1280, %v1302
  %1304 = vmatmul.f32.gmra.mxu0 %v125
  %v1305 = vpop.f32.mrf.mxu0
  %v1306 = vadd.f32 %v1283, %v1305
  %1307 = vdwg.mxu0
  %1308 = vmatpush.msra.mxu0 %v608
  %1309 = vmatpush.msra.mxu0 %v607
  %1310 = vmatpush.msra.mxu0 %v606
  %1311 = vmatpush.msra.mxu0 %v605
  %1312 = vmatpush.msra.mxu0 %v604
  %1313 = vmatpush.msra.mxu0 %v603
  %1314 = vmatpush.msra.mxu0 %v602
  %1315 = vmatpush.msra.mxu0 %v601
  %1316 = vmatpush.msra.mxu0 %v600
  %1317 = vmatpush.msra.mxu0 %v599
  %1318 = vmatpush.msra.mxu0 %v598
  %1319 = vmatpush.msra.mxu0 %v597
  %1320 = vmatpush.msra.mxu0 %v596
  %1321 = vmatpush.msra.mxu0 %v595
  %1322 = vmatpush.msra.mxu0 %v594
  %1323 = vmatpush.msra.mxu0 %v593
  %1324 = vmatmul.f32.gmra.mxu0 %v94
  %v1325 = vpop.f32.mrf.mxu0
  %v1326 = vadd.f32 %v1303, %v1325
  %1327 = vmatmul.f32.gmra.mxu0 %v126
  %v1328 = vpop.f32.mrf.mxu0
  %v1329 = vadd.f32 %v1306, %v1328
  %1330 = vdwg.mxu0
  %1331 = vmatpush.msra.mxu0 %v624
  %1332 = vmatpush.msra.mxu0 %v623
  %1333 = vmatpush.msra.mxu0 %v622
  %1334 = vmatpush.msra.mxu0 %v621
  %1335 = vmatpush.msra.mxu0 %v620
  %1336 = vmatpush.msra.mxu0 %v619
  %1337 = vmatpush.msra.mxu0 %v618
  %1338 = vmatpush.msra.mxu0 %v617
  %1339 = vmatpush.msra.mxu0 %v616
  %1340 = vmatpush.msra.mxu0 %v615
  %1341 = vmatpush.msra.mxu0 %v614
  %1342 = vmatpush.msra.mxu0 %v613
  %1343 = vmatpush.msra.mxu0 %v612
  %1344 = vmatpush.msra.mxu0 %v611
  %1345 = vmatpush.msra.mxu0 %v610
  %1346 = vmatpush.msra.mxu0 %v609
  %1347 = vmatmul.f32.gmra.mxu0 %v95
  %v1348 = vpop.f32.mrf.mxu0
  %v1349 = vadd.f32 %v1326, %v1348
  %1350 = vmatmul.f32.gmra.mxu0 %v127
  %v1351 = vpop.f32.mrf.mxu0
  %v1352 = vadd.f32 %v1329, %v1351
  %1353 = vdwg.mxu0
  %1354 = vmatpush.msra.mxu0 %v640
  %1355 = vmatpush.msra.mxu0 %v639
  %1356 = vmatpush.msra.mxu0 %v638
  %1357 = vmatpush.msra.mxu0 %v637
  %1358 = vmatpush.msra.mxu0 %v636
  %1359 = vmatpush.msra.mxu0 %v635
  %1360 = vmatpush.msra.mxu0 %v634
  %1361 = vmatpush.msra.mxu0 %v633
  %1362 = vmatpush.msra.mxu0 %v632
  %1363 = vmatpush.msra.mxu0 %v631
  %1364 = vmatpush.msra.mxu0 %v630
  %1365 = vmatpush.msra.mxu0 %v629
  %1366 = vmatpush.msra.mxu0 %v628
  %1367 = vmatpush.msra.mxu0 %v627
  %1368 = vmatpush.msra.mxu0 %v626
  %1369 = vmatpush.msra.mxu0 %v625
  %1370 = vmatmul.f32.gmra.mxu0 %v96
  %v1371 = vpop.f32.mrf.mxu0
  %v1372 = vadd.f32 %v1349, %v1371
  %1373 = vmatmul.f32.gmra.mxu0 %v128
  %v1374 = vpop.f32.mrf.mxu0
  %v1375 = vadd.f32 %v1352, %v1374
  %1376 = vdwg.mxu0
  %v1377 = vadd.f32 %v63, %v1372
  %v1378 = vadd.f32 %v64, %v1375
  %vm1379 = vcmask 261120
  %1380 = vst.msk [vmem:[#allocation2] sm:$0xff] %vm1379, %v1377
  %vm1381 = vcmask 260096
  %1382 = vst.msk [vmem:[#allocation2 + $0x8] sm:$0x7f] %vm1381, %v1378
  // Predicated region
  $region14: #{_forward.2} parent=0 // pred_check
    %p1383 = pneg %p55
  $region15: #{_forward.2} parent=0 // pred_check_branch
    %1385 = sbr.rel (%p1383) target = $region17
  $region16: #{_forward.2} parent=0 // pred_region
    %v1386 = vld [vmem:[#allocation2] sm:$0xff]
    %v1387 = vld [vmem:[#allocation2 + $0x8] sm:$0x7f]
    %1388 = vst.msk [vmem:[%s2] sm:$0xff] %vm1379, %v1386
    %1389 = vst.msk [vmem:[%s2 + $0x8] sm:$0x7f] %vm1381, %v1387
  $region17: #{_forward.2} parent=0 // pred_fallthru
    _
  // Predicated region
  $region18: #{_forward.2} parent=0 // pred_check
    _
  $region19: #{_forward.2} parent=0 // pred_check_branch
    %1391 = sbr.rel (0) target = $region21
  $region20: #{_forward.2} parent=0 // pred_region
    _
  $region21: #{_forward.2} parent=0 // pred_fallthru
    _
  // Predicated region
  $region22: #{_forward.2} parent=0 // pred_check
    _
  $region23: #{_forward.2} parent=0 // pred_check_branch
    %1393 = sbr.rel (0) target = $region25
  $region24: #{_forward.2} parent=0 // pred_region
    _
  $region25: #{_forward.2} parent=0 // pred_fallthru
    _

</llo_original>
